<compile_context>
chip_gen: v5e
topology: v5e:2x2
jax: 0.10.0
libtpu: 0.0.40
codegen_flags: <defaults>
</compile_context>

<pallas_src>
import jax
import jax.numpy as jnp
import numpy as np
from jax.experimental import pallas as pl
from jax.experimental.pallas import tpu as pltpu

LANE = 128


# ------------------------------ kernel helpers -------------------------------

def _conv1d_k3_same(x, w_ref, bias, batch, seq_len):
    """'same' Conv1d (k=3, pad=1) over flattened channels-last rows.

    x:     (batch*seq_len, cin) matmul operand (bf16)
    w_ref: (3, cin, cout) VMEM ref; taps stacked on the leading axis
           (tap 0 -> x[t-1], tap 1 -> x[t], tap 2 -> x[t+1])
    bias:  (1, cout) f32

    Each tap is ONE MXU matmul on the un-shifted input; the +/-1 time shifts
    are applied to the lane-dense f32 outputs with pltpu.roll (XLU slot) and
    the conv zero-padding at sequence boundaries is a (rows,1) position mask.
    """
    rows = batch * seq_len
    y_prev = jnp.dot(x, w_ref[0], preferred_element_type=jnp.float32)
    y_cur = jnp.dot(x, w_ref[1], preferred_element_type=jnp.float32)
    y_next = jnp.dot(x, w_ref[2], preferred_element_type=jnp.float32)
    pos = jax.lax.broadcasted_iota(jnp.int32, (rows, 1), 0) % seq_len
    y_prev = jnp.where(pos > 0, pltpu.roll(y_prev, shift=1, axis=0), 0.0)
    y_next = jnp.where(pos < seq_len - 1,
                       pltpu.roll(y_next, shift=rows - 1, axis=0), 0.0)
    return y_prev + y_cur + y_next + bias


# --------------------------- one-time parameter prep --------------------------

def prepare_params(params, lane_pad=LANE):
    """Hoisted weight-layout prep (out of the per-call wrapper):
    conv1 taps folded with the embedding; conv2/fc output channels zero-padded
    to a lane-dense 128; matmul weights cast to bf16; biases kept f32 (1, C)."""
    emb, w1, b1, w2, b2, wf1, bf1, wf2, bf2 = params
    f32, bf16 = jnp.float32, jnp.bfloat16
    c1 = w1.shape[0]                      # 128
    c2 = w2.shape[0]                      # 64
    h1 = wf1.shape[0]                     # 64
    c = wf2.shape[0]                      # num_classes
    cp = ((max(c, 1) + lane_pad - 1) // lane_pad) * lane_pad

    embf = emb.astype(f32)
    # conv1 taps folded with the embedding table: Wk = emb @ w1[:, :, k].T
    wc1 = jnp.stack([embf @ w1[:, :, k].astype(f32).T for k in range(3)],
                    axis=0)                                        # (3, V, 128)
    # conv2 taps, output channels zero-padded to the lane width
    wc2 = jnp.zeros((3, c1, lane_pad), f32).at[:, :, :c2].set(
        jnp.stack([w2[:, :, k].astype(f32).T for k in range(3)], axis=0))
    b2p = jnp.zeros((1, lane_pad), f32).at[:, :c2].set(b2.astype(f32))
    # fc1 / fc2, zero-padded so all activations are lane-dense 128 columns
    wt1 = jnp.zeros((lane_pad, lane_pad), f32).at[:c2, :h1].set(wf1.astype(f32).T)
    bf1p = jnp.zeros((1, lane_pad), f32).at[:, :h1].set(bf1.astype(f32))
    wt2 = jnp.zeros((lane_pad, cp), f32).at[:h1, :c].set(wf2.astype(f32).T)
    bf2p = jnp.zeros((1, cp), f32).at[:, :c].set(bf2.astype(f32))

    return dict(
        wc1=wc1.astype(bf16), b1=b1.reshape(1, c1).astype(f32),
        wc2=wc2.astype(bf16), b2=b2p,
        wt1=wt1.astype(bf16), bf1=bf1p,
        wt2=wt2.astype(bf16), bf2=bf2p,
        vocab=emb.shape[0], num_classes=c,
    )


# ---------------------------------- forward -----------------------------------

def sentiment_cnn_forward(tokens, prep):
    """Fused forward pass.  tokens: (B, L) int32 token ids."""
    b, l = tokens.shape
    vocab = prep["vocab"]
    c1 = prep["b1"].shape[1]          # 128 (conv1 out, lane-dense)
    cpad = prep["b2"].shape[1]        # 128 (padded conv2 / fc widths)
    cp = prep["bf2"].shape[1]         # 128 (padded logits)
    c = prep["num_classes"]
    l2 = l // 3                       # MaxPool1d(3) output length (floor mode)
    assert l2 >= 1, "sequence length must be >= 3"
    bl = b * l

    def kernel(tok_ref, wc1_ref, b1_ref, wc2_ref, b2_ref,
               wt1_ref, bf1_ref, wt2_ref, bf2_ref, out_ref):
        # ---- one-hot tokens (exact 0/1; bf16 for single-pass MXU matmuls) ---
        # Out-of-range ids produce an all-zero row (PyTorch's nn.Embedding
        # would raise).  TODO(synk): for a large vocabulary, replace the
        # one-hot matmul with a DMA row gather.
        tok = tok_ref[...]                                        # (B*L, 1) i32
        vocab_iota = jax.lax.broadcasted_iota(jnp.int32, (bl, vocab), 1)
        onehot = (vocab_iota == tok).astype(jnp.bfloat16)         # (B*L, V)

        # ---- conv1 (embedding folded into the taps) + ReLU -> (B*L, 128) ----
        y = jnp.maximum(_conv1d_k3_same(onehot, wc1_ref, b1_ref[...], b, l),
                        0.0)

        # ---- MaxPool1d(kernel_size=3), floor mode (stride 3) ----------------
        # TODO(synk): at large B*L revisit this sublane regroup: two
        # pltpu.roll + jnp.maximum (window max) + one strided row-select keeps
        # the window max on the XLU slot.
        if l % 3 == 0:
            p = jnp.max(y.reshape(b * l2, 3, c1), axis=1)         # (B*L2, 128)
        else:
            yb = y.reshape(b, l, c1)[:, :l2 * 3, :]
            p = jnp.max(yb.reshape(b, l2, 3, c1), axis=2).reshape(b * l2, c1)

        # ---- conv2 + ReLU -> (B*L2, 128) lane-dense (cols >= 64 stay 0) -----
        z = jnp.maximum(
            _conv1d_k3_same(p.astype(jnp.bfloat16), wc2_ref, b2_ref[...],
                            b, l2),
            0.0)

        # ---- AdaptiveMaxPool1d(1) over time -> (B, 128) ---------------------
        g = jnp.max(z.reshape(b, l2, cpad), axis=1)

        # ---- fc1 + ReLU, dropout(eval)=identity, fc2, sigmoid (lane-dense) --
        h = jnp.maximum(
            jnp.dot(g.astype(jnp.bfloat16), wt1_ref[...],
                    preferred_element_type=jnp.float32) + bf1_ref[...],
            0.0)                                                  # (B, 128)
        logits = (jnp.dot(h.astype(jnp.bfloat16), wt2_ref[...],
                          preferred_element_type=jnp.float32)
                  + bf2_ref[...])                                 # (B, 128)
        # Padded lanes hold sigmoid(0)=0.5; the wrapper slices the real classes.
        out_ref[...] = jax.nn.sigmoid(logits)

    tok_col = tokens.reshape(bl, 1).astype(jnp.int32)

    # Single invocation (no grid): default BlockSpecs map every operand and the
    # output as one full-array VMEM block (total working set ~100 KiB).
    # When scaling B: add a grid over row-blocks of B*L (>=256 rows), mark it
    # dimension_semantics=("parallel",) (2 TCs on v7x) and set
    # vmem_limit_bytes against the per-generation scoped-VMEM default.
    out = pl.pallas_call(
        kernel,
        out_shape=jax.ShapeDtypeStruct((b, cp), jnp.float32),
    )(tok_col, prep["wc1"], prep["b1"], prep["wc2"], prep["b2"],
      prep["wt1"], prep["bf1"], prep["wt2"], prep["bf2"])

    return out[:, :c]                                             # (B, C)


# ----------------------------- pure-JAX reference -----------------------------

def sentiment_cnn_reference(tokens, params):
    emb, w1, b1, w2, b2, wf1, bf1, wf2, bf2 = params
    xe = jnp.take(emb, tokens, axis=0)                 # (B, L, E)
    x = jnp.transpose(xe, (0, 2, 1))                   # (B, E, L)  (NCL)
    dn = ('NCH', 'OIH', 'NCH')
    y = jax.lax.conv_general_dilated(x, w1, (1,), [(1, 1)],
                                     dimension_numbers=dn) + b1[None, :, None]
    y = jnp.maximum(y, 0.0)
    B, C1, L = y.shape
    L2 = L // 3
    p = jnp.max(y[:, :, :L2 * 3].reshape(B, C1, L2, 3), axis=-1)
    z = jax.lax.conv_general_dilated(p, w2, (1,), [(1, 1)],
                                     dimension_numbers=dn) + b2[None, :, None]
    z = jnp.maximum(z, 0.0)
    g = jnp.max(z, axis=-1)                            # (B, 64)
    h = jnp.maximum(g @ wf1.T + bf1, 0.0)
    logits = h @ wf2.T + bf2
    return jax.nn.sigmoid(logits)


# ------------------------------------ main ------------------------------------

if __name__ == "__main__":
    VOCAB, EMB, NUM_CLASSES = 50, 32, 2
    B, L = 2, 24

    key = jax.random.PRNGKey(0)
    ks = jax.random.split(key, 10)
    f32 = jnp.float32
    params = (
        jax.random.normal(ks[0], (VOCAB, EMB), f32) * 0.1,          # embedding
        jax.random.normal(ks[1], (128, EMB, 3), f32) * 0.1,         # conv1 W (O,I,K)
        jax.random.normal(ks[2], (128,), f32) * 0.1,                # conv1 b
        jax.random.normal(ks[3], (64, 128, 3), f32) * 0.1,          # conv2 W
        jax.random.normal(ks[4], (64,), f32) * 0.1,                 # conv2 b
        jax.random.normal(ks[5], (64, 64), f32) * 0.1,              # fc1 W (out,in)
        jax.random.normal(ks[6], (64,), f32) * 0.1,                 # fc1 b
        jax.random.normal(ks[7], (NUM_CLASSES, 64), f32) * 0.1,     # fc2 W
        jax.random.normal(ks[8], (NUM_CLASSES,), f32) * 0.1,        # fc2 b
    )
    tokens = jax.random.randint(ks[9], (B, L), 0, VOCAB, dtype=jnp.int32)

    prep = prepare_params(params)                       # one-time layout prep
    out = sentiment_cnn_forward(tokens, prep)
    out = jax.block_until_ready(out)

    ref = jax.block_until_ready(sentiment_cnn_reference(tokens, params))
    # bf16 matmul operands (f32 accumulation) -> looser tolerance than the
    # all-f32 variant; sigmoid outputs agree to ~1e-3 in practice.
    np.testing.assert_allclose(np.asarray(out), np.asarray(ref),
                               rtol=2e-2, atol=2e-2)

    print("KERNEL_OK")
</pallas_src>

<mosaic_0001>
module attributes {stable_mosaic.version = 11 : i64} {
  func.func @kernel(%arg0: memref<48x1xi32, #tpu.memory_space<vmem>>, %arg1: memref<3x50x128xbf16, #tpu.memory_space<vmem>>, %arg2: memref<1x128xf32, #tpu.memory_space<vmem>>, %arg3: memref<3x128x128xbf16, #tpu.memory_space<vmem>>, %arg4: memref<1x128xf32, #tpu.memory_space<vmem>>, %arg5: memref<128x128xbf16, #tpu.memory_space<vmem>>, %arg6: memref<1x128xf32, #tpu.memory_space<vmem>>, %arg7: memref<128x128xbf16, #tpu.memory_space<vmem>>, %arg8: memref<1x128xf32, #tpu.memory_space<vmem>>, %arg9: memref<2x128xf32, #tpu.memory_space<vmem>>) attributes {dimension_semantics = [], scalar_prefetch = 0 : i64, scratch_operands = 0 : i64, tpu.core_type = #tpu.core_type<tc>} {
    %c0 = arith.constant 0 : index
    %c0_0 = arith.constant 0 : index
    %0 = vector.load %arg0[%c0, %c0_0] : memref<48x1xi32, #tpu.memory_space<vmem>>, vector<48x1xi32>
    %1 = tpu.iota {dimensions = array<i32: 1>} : vector<48x50xi32>
    %2 = vector.broadcast %0 : vector<48x1xi32> to vector<48x50xi32>
    %3 = arith.cmpi eq, %1, %2 : vector<48x50xi32>
    %4 = arith.extui %3 : vector<48x50xi1> to vector<48x50xi32>
    %5 = arith.sitofp %4 : vector<48x50xi32> to vector<48x50xf32>
    %6 = arith.truncf %5 : vector<48x50xf32> to vector<48x50xbf16>
    %c0_1 = arith.constant 0 : index
    %c0_2 = arith.constant 0 : index
    %7 = vector.load %arg2[%c0_1, %c0_2] : memref<1x128xf32, #tpu.memory_space<vmem>>, vector<1x128xf32>
    %c0_3 = arith.constant 0 : index
    %c0_4 = arith.constant 0 : index
    %c0_5 = arith.constant 0 : index
    %8 = vector.load %arg1[%c0_3, %c0_4, %c0_5] : memref<3x50x128xbf16, #tpu.memory_space<vmem>>, vector<1x50x128xbf16>
    %9 = vector.shape_cast %8 : vector<1x50x128xbf16> to vector<50x128xbf16>
    %cst = arith.constant dense<0.000000e+00> : vector<48x128xf32>
    %10 = tpu.matmul %6, %9, %cst {dimension_numbers = #tpu.dot_dimension_numbers<[1], [0], [0], [1], [0, 0, 1, 1], [], []>} : vector<48x50xbf16>, vector<50x128xbf16>, vector<48x128xf32> -> vector<48x128xf32>
    %c1 = arith.constant 1 : index
    %c0_6 = arith.constant 0 : index
    %c0_7 = arith.constant 0 : index
    %11 = vector.load %arg1[%c1, %c0_6, %c0_7] : memref<3x50x128xbf16, #tpu.memory_space<vmem>>, vector<1x50x128xbf16>
    %12 = vector.shape_cast %11 : vector<1x50x128xbf16> to vector<50x128xbf16>
    %cst_8 = arith.constant dense<0.000000e+00> : vector<48x128xf32>
    %13 = tpu.matmul %6, %12, %cst_8 {dimension_numbers = #tpu.dot_dimension_numbers<[1], [0], [0], [1], [0, 0, 1, 1], [], []>} : vector<48x50xbf16>, vector<50x128xbf16>, vector<48x128xf32> -> vector<48x128xf32>
    %c2 = arith.constant 2 : index
    %c0_9 = arith.constant 0 : index
    %c0_10 = arith.constant 0 : index
    %14 = vector.load %arg1[%c2, %c0_9, %c0_10] : memref<3x50x128xbf16, #tpu.memory_space<vmem>>, vector<1x50x128xbf16>
    %15 = vector.shape_cast %14 : vector<1x50x128xbf16> to vector<50x128xbf16>
    %cst_11 = arith.constant dense<0.000000e+00> : vector<48x128xf32>
    %16 = tpu.matmul %6, %15, %cst_11 {dimension_numbers = #tpu.dot_dimension_numbers<[1], [0], [0], [1], [0, 0, 1, 1], [], []>} : vector<48x50xbf16>, vector<50x128xbf16>, vector<48x128xf32> -> vector<48x128xf32>
    %17 = tpu.iota {dimensions = array<i32: 0>} : vector<48x1xi32>
    %c24_i32 = arith.constant 24 : i32
    %c0_i32 = arith.constant 0 : i32
    %18 = arith.cmpi eq, %c24_i32, %c0_i32 : i32
    %c1_i32 = arith.constant 1 : i32
    %19 = arith.select %18, %c1_i32, %c24_i32 : i32
    %20 = vector.broadcast %19 : i32 to vector<48x1xi32>
    %21 = arith.remsi %17, %20 : vector<48x1xi32>
    %c0_i32_12 = arith.constant 0 : i32
    %22 = vector.broadcast %c0_i32_12 : i32 to vector<48x1xi32>
    %23 = arith.cmpi ne, %21, %22 : vector<48x1xi32>
    %c0_i32_13 = arith.constant 0 : i32
    %24 = vector.broadcast %c0_i32_13 : i32 to vector<48x1xi32>
    %25 = arith.cmpi slt, %21, %24 : vector<48x1xi32>
    %c0_i32_14 = arith.constant 0 : i32
    %26 = arith.cmpi slt, %19, %c0_i32_14 : i32
    %27 = vector.broadcast %26 : i1 to vector<48x1xi1>
    %28 = vector.broadcast %27 : vector<48x1xi1> to vector<48x1xi1>
    %29 = arith.xori %25, %28 : vector<48x1xi1>
    %30 = arith.andi %29, %23 : vector<48x1xi1>
    %31 = vector.broadcast %19 : i32 to vector<48x1xi32>
    %32 = arith.addi %21, %31 : vector<48x1xi32>
    %33 = arith.select %30, %32, %21 : vector<48x1xi1>, vector<48x1xi32>
    %c0_i32_15 = arith.constant 0 : i32
    %34 = vector.broadcast %c0_i32_15 : i32 to vector<48x1xi32>
    %35 = arith.cmpi sgt, %33, %34 : vector<48x1xi32>
    %c1_i32_16 = arith.constant 1 : i32
    %36 = tpu.dynamic_rotate %10 by %c1_i32_16 dim 0 : vector<48x128xf32>, i32 -> vector<48x128xf32>
    %cst_17 = arith.constant 0.000000e+00 : f32
    %37 = vector.shape_cast %35 : vector<48x1xi1> to vector<48x1xi1>
    %38 = vector.broadcast %37 : vector<48x1xi1> to vector<48x128xi1>
    %39 = vector.broadcast %cst_17 : f32 to vector<48x128xf32>
    %40 = arith.select %38, %36, %39 : vector<48x128xi1>, vector<48x128xf32>
    %c23_i32 = arith.constant 23 : i32
    %41 = vector.broadcast %c23_i32 : i32 to vector<48x1xi32>
    %42 = arith.cmpi slt, %33, %41 : vector<48x1xi32>
    %c47_i32 = arith.constant 47 : i32
    %43 = tpu.dynamic_rotate %16 by %c47_i32 dim 0 : vector<48x128xf32>, i32 -> vector<48x128xf32>
    %cst_18 = arith.constant 0.000000e+00 : f32
    %44 = vector.shape_cast %42 : vector<48x1xi1> to vector<48x1xi1>
    %45 = vector.broadcast %44 : vector<48x1xi1> to vector<48x128xi1>
    %46 = vector.broadcast %cst_18 : f32 to vector<48x128xf32>
    %47 = arith.select %45, %43, %46 : vector<48x128xi1>, vector<48x128xf32>
    %48 = arith.addf %40, %13 : vector<48x128xf32>
    %49 = arith.addf %48, %47 : vector<48x128xf32>
    %50 = vector.broadcast %7 : vector<1x128xf32> to vector<48x128xf32>
    %51 = arith.addf %49, %50 : vector<48x128xf32>
    %cst_19 = arith.constant 0.000000e+00 : f32
    %52 = vector.broadcast %cst_19 : f32 to vector<48x128xf32>
    %53 = arith.maximumf %51, %52 : vector<48x128xf32>
    %54 = vector.shape_cast %53 : vector<48x128xf32> to vector<16x3x128xf32>
    %cst_20 = arith.constant dense<0xFF800000> : vector<16x128xf32>
    %55 = vector.multi_reduction <maximumf>, %54, %cst_20 [1] : vector<16x3x128xf32> to vector<16x128xf32>
    %56 = arith.truncf %55 : vector<16x128xf32> to vector<16x128xbf16>
    %c0_21 = arith.constant 0 : index
    %c0_22 = arith.constant 0 : index
    %57 = vector.load %arg4[%c0_21, %c0_22] : memref<1x128xf32, #tpu.memory_space<vmem>>, vector<1x128xf32>
    %c0_23 = arith.constant 0 : index
    %c0_24 = arith.constant 0 : index
    %c0_25 = arith.constant 0 : index
    %58 = vector.load %arg3[%c0_23, %c0_24, %c0_25] : memref<3x128x128xbf16, #tpu.memory_space<vmem>>, vector<1x128x128xbf16>
    %59 = vector.shape_cast %58 : vector<1x128x128xbf16> to vector<128x128xbf16>
    %cst_26 = arith.constant dense<0.000000e+00> : vector<16x128xf32>
    %60 = tpu.matmul %56, %59, %cst_26 {dimension_numbers = #tpu.dot_dimension_numbers<[1], [0], [0], [1], [0, 0, 1, 1], [], []>} : vector<16x128xbf16>, vector<128x128xbf16>, vector<16x128xf32> -> vector<16x128xf32>
    %c1_27 = arith.constant 1 : index
    %c0_28 = arith.constant 0 : index
    %c0_29 = arith.constant 0 : index
    %61 = vector.load %arg3[%c1_27, %c0_28, %c0_29] : memref<3x128x128xbf16, #tpu.memory_space<vmem>>, vector<1x128x128xbf16>
    %62 = vector.shape_cast %61 : vector<1x128x128xbf16> to vector<128x128xbf16>
    %cst_30 = arith.constant dense<0.000000e+00> : vector<16x128xf32>
    %63 = tpu.matmul %56, %62, %cst_30 {dimension_numbers = #tpu.dot_dimension_numbers<[1], [0], [0], [1], [0, 0, 1, 1], [], []>} : vector<16x128xbf16>, vector<128x128xbf16>, vector<16x128xf32> -> vector<16x128xf32>
    %c2_31 = arith.constant 2 : index
    %c0_32 = arith.constant 0 : index
    %c0_33 = arith.constant 0 : index
    %64 = vector.load %arg3[%c2_31, %c0_32, %c0_33] : memref<3x128x128xbf16, #tpu.memory_space<vmem>>, vector<1x128x128xbf16>
    %65 = vector.shape_cast %64 : vector<1x128x128xbf16> to vector<128x128xbf16>
    %cst_34 = arith.constant dense<0.000000e+00> : vector<16x128xf32>
    %66 = tpu.matmul %56, %65, %cst_34 {dimension_numbers = #tpu.dot_dimension_numbers<[1], [0], [0], [1], [0, 0, 1, 1], [], []>} : vector<16x128xbf16>, vector<128x128xbf16>, vector<16x128xf32> -> vector<16x128xf32>
    %67 = tpu.iota {dimensions = array<i32: 0>} : vector<16x1xi32>
    %c8_i32 = arith.constant 8 : i32
    %c0_i32_35 = arith.constant 0 : i32
    %68 = arith.cmpi eq, %c8_i32, %c0_i32_35 : i32
    %c1_i32_36 = arith.constant 1 : i32
    %69 = arith.select %68, %c1_i32_36, %c8_i32 : i32
    %70 = vector.broadcast %69 : i32 to vector<16x1xi32>
    %71 = arith.remsi %67, %70 : vector<16x1xi32>
    %c0_i32_37 = arith.constant 0 : i32
    %72 = vector.broadcast %c0_i32_37 : i32 to vector<16x1xi32>
    %73 = arith.cmpi ne, %71, %72 : vector<16x1xi32>
    %c0_i32_38 = arith.constant 0 : i32
    %74 = vector.broadcast %c0_i32_38 : i32 to vector<16x1xi32>
    %75 = arith.cmpi slt, %71, %74 : vector<16x1xi32>
    %c0_i32_39 = arith.constant 0 : i32
    %76 = arith.cmpi slt, %69, %c0_i32_39 : i32
    %77 = vector.broadcast %76 : i1 to vector<16x1xi1>
    %78 = vector.broadcast %77 : vector<16x1xi1> to vector<16x1xi1>
    %79 = arith.xori %75, %78 : vector<16x1xi1>
    %80 = arith.andi %79, %73 : vector<16x1xi1>
    %81 = vector.broadcast %69 : i32 to vector<16x1xi32>
    %82 = arith.addi %71, %81 : vector<16x1xi32>
    %83 = arith.select %80, %82, %71 : vector<16x1xi1>, vector<16x1xi32>
    %c0_i32_40 = arith.constant 0 : i32
    %84 = vector.broadcast %c0_i32_40 : i32 to vector<16x1xi32>
    %85 = arith.cmpi sgt, %83, %84 : vector<16x1xi32>
    %c1_i32_41 = arith.constant 1 : i32
    %86 = tpu.dynamic_rotate %60 by %c1_i32_41 dim 0 : vector<16x128xf32>, i32 -> vector<16x128xf32>
    %cst_42 = arith.constant 0.000000e+00 : f32
    %87 = vector.shape_cast %85 : vector<16x1xi1> to vector<16x1xi1>
    %88 = vector.broadcast %87 : vector<16x1xi1> to vector<16x128xi1>
    %89 = vector.broadcast %cst_42 : f32 to vector<16x128xf32>
    %90 = arith.select %88, %86, %89 : vector<16x128xi1>, vector<16x128xf32>
    %c7_i32 = arith.constant 7 : i32
    %91 = vector.broadcast %c7_i32 : i32 to vector<16x1xi32>
    %92 = arith.cmpi slt, %83, %91 : vector<16x1xi32>
    %c15_i32 = arith.constant 15 : i32
    %93 = tpu.dynamic_rotate %66 by %c15_i32 dim 0 : vector<16x128xf32>, i32 -> vector<16x128xf32>
    %cst_43 = arith.constant 0.000000e+00 : f32
    %94 = vector.shape_cast %92 : vector<16x1xi1> to vector<16x1xi1>
    %95 = vector.broadcast %94 : vector<16x1xi1> to vector<16x128xi1>
    %96 = vector.broadcast %cst_43 : f32 to vector<16x128xf32>
    %97 = arith.select %95, %93, %96 : vector<16x128xi1>, vector<16x128xf32>
    %98 = arith.addf %90, %63 : vector<16x128xf32>
    %99 = arith.addf %98, %97 : vector<16x128xf32>
    %100 = vector.broadcast %57 : vector<1x128xf32> to vector<16x128xf32>
    %101 = arith.addf %99, %100 : vector<16x128xf32>
    %cst_44 = arith.constant 0.000000e+00 : f32
    %102 = vector.broadcast %cst_44 : f32 to vector<16x128xf32>
    %103 = arith.maximumf %101, %102 : vector<16x128xf32>
    %104 = vector.shape_cast %103 : vector<16x128xf32> to vector<2x8x128xf32>
    %cst_45 = arith.constant dense<0xFF800000> : vector<2x128xf32>
    %105 = vector.multi_reduction <maximumf>, %104, %cst_45 [1] : vector<2x8x128xf32> to vector<2x128xf32>
    %106 = arith.truncf %105 : vector<2x128xf32> to vector<2x128xbf16>
    %c0_46 = arith.constant 0 : index
    %c0_47 = arith.constant 0 : index
    %107 = vector.load %arg5[%c0_46, %c0_47] : memref<128x128xbf16, #tpu.memory_space<vmem>>, vector<128x128xbf16>
    %cst_48 = arith.constant dense<0.000000e+00> : vector<2x128xf32>
    %108 = tpu.matmul %106, %107, %cst_48 {dimension_numbers = #tpu.dot_dimension_numbers<[1], [0], [0], [1], [0, 0, 1, 1], [], []>} : vector<2x128xbf16>, vector<128x128xbf16>, vector<2x128xf32> -> vector<2x128xf32>
    %c0_49 = arith.constant 0 : index
    %c0_50 = arith.constant 0 : index
    %109 = vector.load %arg6[%c0_49, %c0_50] : memref<1x128xf32, #tpu.memory_space<vmem>>, vector<1x128xf32>
    %110 = vector.broadcast %109 : vector<1x128xf32> to vector<2x128xf32>
    %111 = arith.addf %108, %110 : vector<2x128xf32>
    %cst_51 = arith.constant 0.000000e+00 : f32
    %112 = vector.broadcast %cst_51 : f32 to vector<2x128xf32>
    %113 = arith.maximumf %111, %112 : vector<2x128xf32>
    %114 = arith.truncf %113 : vector<2x128xf32> to vector<2x128xbf16>
    %c0_52 = arith.constant 0 : index
    %c0_53 = arith.constant 0 : index
    %115 = vector.load %arg7[%c0_52, %c0_53] : memref<128x128xbf16, #tpu.memory_space<vmem>>, vector<128x128xbf16>
    %cst_54 = arith.constant dense<0.000000e+00> : vector<2x128xf32>
    %116 = tpu.matmul %114, %115, %cst_54 {dimension_numbers = #tpu.dot_dimension_numbers<[1], [0], [0], [1], [0, 0, 1, 1], [], []>} : vector<2x128xbf16>, vector<128x128xbf16>, vector<2x128xf32> -> vector<2x128xf32>
    %c0_55 = arith.constant 0 : index
    %c0_56 = arith.constant 0 : index
    %117 = vector.load %arg8[%c0_55, %c0_56] : memref<1x128xf32, #tpu.memory_space<vmem>>, vector<1x128xf32>
    %118 = vector.broadcast %117 : vector<1x128xf32> to vector<2x128xf32>
    %119 = arith.addf %116, %118 : vector<2x128xf32>
    %120 = arith.negf %119 : vector<2x128xf32>
    %121 = math.exp %120 : vector<2x128xf32>
    %cst_57 = arith.constant 1.000000e+00 : f32
    %122 = vector.broadcast %cst_57 : f32 to vector<2x128xf32>
    %123 = arith.addf %122, %121 : vector<2x128xf32>
    %124 = arith.divf %122, %123 : vector<2x128xf32>
    %c0_58 = arith.constant 0 : index
    %c0_59 = arith.constant 0 : index
    %125 = vector.load %arg9[%c0_58, %c0_59] : memref<2x128xf32, #tpu.memory_space<vmem>>, vector<2x128xf32>
    tpu.vector_store %arg9[%c0_58, %c0_59], %124 {strides = array<i32>} : memref<2x128xf32, #tpu.memory_space<vmem>>, vector<2x128xf32>,
    return
  }
}

</mosaic_0001>

<llo_original>
// kernel: tpu_custom_call.1
$region0: #{tpu_custom_call.1}
  #allocation0 [shape = 'u32[]', space=smem, size = 0x4, offset = 0x4, fixed_abs, tag = 'smem constant byte address 0x4 - core index']
  #allocation1 [shape = 'u32[72,128]{1,0:T(1,128)}', space=vmem, size = 0x9000, scoped, tag = 'internal scratch']
  %s0 = inlined_call_operand.vmem [shape: s32[48,1], index: 0, kind: input, shape index: {}]
  %s1 = inlined_call_operand.hbm [shape: bf16[3,50,128], index: 1, kind: input, shape index: {}]
  %s2 = inlined_call_operand.vmem [shape: f32[1,128], index: 2, kind: input, shape index: {}]
  %s3 = inlined_call_operand.hbm [shape: bf16[3,128,128], index: 3, kind: input, shape index: {}]
  %s4 = inlined_call_operand.vmem [shape: f32[1,128], index: 4, kind: input, shape index: {}]
  %s5 = inlined_call_operand.hbm [shape: bf16[128,128], index: 5, kind: input, shape index: {}]
  %s6 = inlined_call_operand.vmem [shape: f32[1,128], index: 6, kind: input, shape index: {}]
  %s7 = inlined_call_operand.hbm [shape: bf16[128,128], index: 7, kind: input, shape index: {}]
  %s8 = inlined_call_operand.vmem [shape: f32[1,128], index: 8, kind: input, shape index: {}]
  %s9 = inlined_call_operand.hbm [shape: f32[2,128], index: 9, kind: output, shape index: {}]
  %s10 = sld [smem:[#allocation0]]
  $region62: #{tpu_custom_call.1} parent=0
    _
  %s12 = ssub.s32 1, %s10
  %s13 = scalar_select 0, %s12, %s10
  $region1: #{tpu_custom_call.1} parent=0
    #allocation2 [shape = 'u8[43008]{0}', space=vmem, size = 0xa800, scoped, tag = 'input window, operand 1, single buffered']
    #allocation3 [shape = 's32[1]{0}', space=sflag, size = 0x4, scoped, tag = 'scoped memory for tpu_custom_call.1']
    #allocation4 [shape = 's32[1]{0}', space=sflag, size = 0x4, scoped, tag = 'scoped memory for tpu_custom_call.1']
    #allocation5 [shape = 'u8[98304]{0}', space=vmem, size = 0x18000, scoped, tag = 'input window, operand 3, single buffered']
    #allocation6 [shape = 's32[1]{0}', space=sflag, size = 0x4, scoped, tag = 'scoped memory for tpu_custom_call.1']
    #allocation7 [shape = 'u8[32768]{0}', space=vmem, size = 0x8000, scoped, tag = 'input window, operand 5, single buffered']
    #allocation8 [shape = 'u8[32768]{0}', space=vmem, size = 0x8000, scoped, tag = 'input window, operand 7, single buffered']
    #allocation9 [shape = 's32[1]{0}', space=sflag, size = 0x4, scoped, tag = 'scoped memory for tpu_custom_call.1']
    #allocation10 [shape = 'u8[1024]{0}', space=vmem, size = 0x400, scoped, tag = 'output window, operand 0, single buffered']
    %14 = vsyncpa [#allocation3], 0
    %15 = vsyncpa [#allocation6], 0
    %16 = vsyncpa [#allocation9], 0
    %17 = vsyncpa [#allocation4], 0
    // Predicated region
    $region2: #{tpu_custom_call.1} parent=1 // pred_check
      _
    $region3: #{tpu_custom_call.1} parent=1 // pred_check_branch
      %19 = sbr.rel (0) target = $region5
    $region4: #{tpu_custom_call.1} parent=1 // pred_region
      _
    $region5: #{tpu_custom_call.1} parent=1 // pred_fallthru
      _
    // Predicated region
    $region6: #{tpu_custom_call.1} parent=1 // pred_check
      _
    $region7: #{tpu_custom_call.1} parent=1 // pred_check_branch
      %21 = sbr.rel (0) target = $region9
    $region8: #{tpu_custom_call.1} parent=1 // pred_region
      %23 = vsyncadd [#allocation3], 0
      %s24 = sshll.u32 %s1, 4
      %s25 = int_to_ptr.hbm [resolvable:$true] %s24
      %s26 = sshll.u32 [#allocation2], 4
      %s27 = int_to_ptr.vmem [resolvable:$true] %s26
      %32 = dma.hbm_to_vmem [thread:$0]  %s25, 1344, %s27, [#allocation3], 64, 64, 4
    $region9: #{tpu_custom_call.1} parent=1 // pred_fallthru
      _
    // Predicated region
    $region10: #{tpu_custom_call.1} parent=1 // pred_check
      _
    $region11: #{tpu_custom_call.1} parent=1 // pred_check_branch
      %34 = sbr.rel (0) target = $region13
    $region12: #{tpu_custom_call.1} parent=1 // pred_region
      _
    $region13: #{tpu_custom_call.1} parent=1 // pred_fallthru
      _
    // Predicated region
    $region14: #{tpu_custom_call.1} parent=1 // pred_check
      _
    $region15: #{tpu_custom_call.1} parent=1 // pred_check_branch
      %36 = sbr.rel (0) target = $region17
    $region16: #{tpu_custom_call.1} parent=1 // pred_region
      %38 = vsyncadd [#allocation6], 0
      %s39 = sshll.u32 %s3, 4
      %s40 = int_to_ptr.hbm [resolvable:$true] %s39
      %s41 = sshll.u32 [#allocation5], 4
      %s42 = int_to_ptr.vmem [resolvable:$true] %s41
      %47 = dma.hbm_to_vmem [thread:$0]  %s40, 3072, %s42, [#allocation6], 64, 64, 4
    $region17: #{tpu_custom_call.1} parent=1 // pred_fallthru
      _
    // Predicated region
    $region18: #{tpu_custom_call.1} parent=1 // pred_check
      _
    $region19: #{tpu_custom_call.1} parent=1 // pred_check_branch
      %49 = sbr.rel (0) target = $region21
    $region20: #{tpu_custom_call.1} parent=1 // pred_region
      _
    $region21: #{tpu_custom_call.1} parent=1 // pred_fallthru
      _
    // Predicated region
    $region22: #{tpu_custom_call.1} parent=1 // pred_check
      _
    $region23: #{tpu_custom_call.1} parent=1 // pred_check_branch
      %51 = sbr.rel (0) target = $region25
    $region24: #{tpu_custom_call.1} parent=1 // pred_region
      %53 = vsyncadd [#allocation6], 0
      %s54 = sshll.u32 %s5, 4
      %s55 = int_to_ptr.hbm [resolvable:$true] %s54
      %s56 = sshll.u32 [#allocation7], 4
      %s57 = int_to_ptr.vmem [resolvable:$true] %s56
      %62 = dma.hbm_to_vmem [thread:$0]  %s55, 1024, %s57, [#allocation6], 64, 64, 4
    $region25: #{tpu_custom_call.1} parent=1 // pred_fallthru
      _
    // Predicated region
    $region26: #{tpu_custom_call.1} parent=1 // pred_check
      _
    $region27: #{tpu_custom_call.1} parent=1 // pred_check_branch
      %64 = sbr.rel (0) target = $region29
    $region28: #{tpu_custom_call.1} parent=1 // pred_region
      _
    $region29: #{tpu_custom_call.1} parent=1 // pred_fallthru
      _
    // Predicated region
    $region30: #{tpu_custom_call.1} parent=1 // pred_check
      _
    $region31: #{tpu_custom_call.1} parent=1 // pred_check_branch
      %66 = sbr.rel (0) target = $region33
    $region32: #{tpu_custom_call.1} parent=1 // pred_region
      %68 = vsyncadd [#allocation9], 0
      %s69 = sshll.u32 %s7, 4
      %s70 = int_to_ptr.hbm [resolvable:$true] %s69
      %s71 = sshll.u32 [#allocation8], 4
      %s72 = int_to_ptr.vmem [resolvable:$true] %s71
      %77 = dma.hbm_to_vmem [thread:$0]  %s70, 1024, %s72, [#allocation9], 64, 64, 4
    $region33: #{tpu_custom_call.1} parent=1 // pred_fallthru
      _
    // Predicated region
    $region34: #{tpu_custom_call.1} parent=1 // pred_check
      _
    $region35: #{tpu_custom_call.1} parent=1 // pred_check_branch
      %79 = sbr.rel (0) target = $region37
    $region36: #{tpu_custom_call.1} parent=1 // pred_region
      _
    $region37: #{tpu_custom_call.1} parent=1 // pred_fallthru
      _
    // Predicated region
    $region38: #{tpu_custom_call.1} parent=1 // pred_check
      _
    $region39: #{tpu_custom_call.1} parent=1 // pred_check_branch
      %81 = sbr.rel (0) target = $region41
    $region40: #{tpu_custom_call.1} parent=1 // pred_region
      %83 = dma.done [#allocation3], 1344
    $region41: #{tpu_custom_call.1} parent=1 // pred_fallthru
      _
    // Predicated region
    $region42: #{tpu_custom_call.1} parent=1 // pred_check
      _
    $region43: #{tpu_custom_call.1} parent=1 // pred_check_branch
      %85 = sbr.rel (0) target = $region45
    $region44: #{tpu_custom_call.1} parent=1 // pred_region
      %87 = dma.done [#allocation6], 3072
    $region45: #{tpu_custom_call.1} parent=1 // pred_fallthru
      _
    // Predicated region
    $region46: #{tpu_custom_call.1} parent=1 // pred_check
      _
    $region47: #{tpu_custom_call.1} parent=1 // pred_check_branch
      %89 = sbr.rel (0) target = $region49
    $region48: #{tpu_custom_call.1} parent=1 // pred_region
      %91 = dma.done [#allocation6], 1024
    $region49: #{tpu_custom_call.1} parent=1 // pred_fallthru
      _
    // Predicated region
    $region50: #{tpu_custom_call.1} parent=1 // pred_check
      _
    $region51: #{tpu_custom_call.1} parent=1 // pred_check_branch
      %93 = sbr.rel (0) target = $region53
    $region52: #{tpu_custom_call.1} parent=1 // pred_region
      %95 = dma.done [#allocation9], 1024
    $region53: #{tpu_custom_call.1} parent=1 // pred_fallthru
      _
    %v97 = vld [vmem:[%s0] sm:$0xff]
    %v98 = vld [vmem:[%s0 + $0x8] sm:$0xff]
    %v99 = vld [vmem:[%s0 + $0x10] sm:$0xff]
    %v100 = vld [vmem:[%s0 + $0x18] sm:$0xff]
    %v101 = vld [vmem:[%s0 + $0x20] sm:$0xff]
    %v102 = vld [vmem:[%s0 + $0x28] sm:$0xff]
    %v103 = vlaneseq
    %v104 = vand.u32 %v103, 127
    %105 = vset.pattern.permute.xlu0 0
    %106 = vperm.xlu0 %105, %v97
    %v107 = vpop.permute.xlu0 %106
    %108 = vset.pattern.permute.xlu0 0
    %109 = vperm.xlu0 %108, %v98
    %v110 = vpop.permute.xlu0 %109
    %111 = vset.pattern.permute.xlu0 0
    %112 = vperm.xlu0 %111, %v99
    %v113 = vpop.permute.xlu0 %112
    %114 = vset.pattern.permute.xlu0 0
    %115 = vperm.xlu0 %114, %v100
    %v116 = vpop.permute.xlu0 %115
    %117 = vset.pattern.permute.xlu0 0
    %118 = vperm.xlu0 %117, %v101
    %v119 = vpop.permute.xlu0 %118
    %120 = vset.pattern.permute.xlu0 0
    %121 = vperm.xlu0 %120, %v102
    %v122 = vpop.permute.xlu0 %121
    %vm123 = vcmp.eq.s32.totalorder %v104, %v107
    %vm124 = vcmp.eq.s32.totalorder %v104, %v110
    %vm125 = vcmp.eq.s32.totalorder %v104, %v113
    %vm126 = vcmp.eq.s32.totalorder %v104, %v116
    %vm127 = vcmp.eq.s32.totalorder %v104, %v119
    %vm128 = vcmp.eq.s32.totalorder %v104, %v122
    %v129 = vsel %vm123, 1, 0
    %v130 = vsel %vm124, 1, 0
    %v131 = vsel %vm125, 1, 0
    %v132 = vsel %vm126, 1, 0
    %v133 = vsel %vm127, 1, 0
    %v134 = vsel %vm128, 1, 0
    %v135 = vcvt.s32.f32 %v129
    %v136 = vcvt.s32.f32 %v130
    %v137 = vcvt.s32.f32 %v131
    %v138 = vcvt.s32.f32 %v132
    %v139 = vcvt.s32.f32 %v133
    %v140 = vcvt.s32.f32 %v134
    %v141 = vpack.c.bf16 %v136, %v135
    %v142 = vpack.c.bf16 %v138, %v137
    %v143 = vpack.c.bf16 %v140, %v139
    %v144 = vld [vmem:[%s2] sm:$0x1]
    %v145 = vld [vmem:[#allocation2] sm:$0xf]
    %v146 = vld [vmem:[#allocation2 + $0x4] sm:$0xf]
    %v147 = vld [vmem:[#allocation2 + $0x8] sm:$0xf]
    %v148 = vld [vmem:[#allocation2 + $0xc] sm:$0xf]
    %v149 = vld [vmem:[#allocation2 + $0x10] sm:$0xf]
    %v150 = vld [vmem:[#allocation2 + $0x14] sm:$0xf]
    %v151 = vld [vmem:[#allocation2 + $0x18] sm:$0x1]
    %v159 = vunpack.c.l.b16 %v145
    %v160 = vunpack.c.l.b16 %v146
    %v161 = vunpack.c.l.b16 %v147
    %v162 = vunpack.c.l.b16 %v148
    %v163 = vunpack.c.l.b16 %v149
    %v164 = vunpack.c.l.b16 %v150
    %v165 = vunpack.c.l.b16 %v151
    %v166 = vpack.c.b16 %v160, %v159
    %v167 = vpack.c.b16 %v162, %v161
    %v168 = vpack.c.b16 %v164, %v163
    %v169 = vpack.c.b16 %v165, %v165
    %vm173 = vcmask 408576
    %v175 = vsel %vm173, %v141, 0
    %v178 = vsel %vm173, %v142, 0
    %v181 = vsel %vm173, %v143, 0
    %vm183 = vcmask 1040384
    %v185 = vsel %vm183, %v169, 0
    %187 = vmatpush.bf16.msra.mxu0 0
    %188 = vmatpush.bf16.msra.mxu0 0
    %189 = vmatpush.bf16.msra.mxu0 0
    %190 = vmatpush.bf16.msra.mxu0 0
    %191 = vmatpush.bf16.msra.mxu0 %v185
    %192 = vmatpush.bf16.msra.mxu0 %v168
    %193 = vmatpush.bf16.msra.mxu0 %v167
    %194 = vmatpush.bf16.msra.mxu0 %v166
    %195 = vmatmul.bf16.gmra.mxu0 %v175
    %v196 = vpop.f32.mrf.mxu0
    %v197 = vadd.f32 0.0, %v196
    %v198 = vpop.f32.mrf.mxu0
    %v199 = vadd.f32 0.0, %v198
    %200 = vmatmul.bf16.gmra.mxu0 %v178
    %v201 = vpop.f32.mrf.mxu0
    %v202 = vadd.f32 0.0, %v201
    %v203 = vpop.f32.mrf.mxu0
    %v204 = vadd.f32 0.0, %v203
    %205 = vmatmul.bf16.gmra.mxu0 %v181
    %v206 = vpop.f32.mrf.mxu0
    %v207 = vadd.f32 0.0, %v206
    %v208 = vpop.f32.mrf.mxu0
    %v209 = vadd.f32 0.0, %v208
    %210 = vdwg.mxu0
    %s211 = scalar_lea.vmem [#allocation2], 28
    %v212 = vld [vmem:[%s211] sm:$0xf]
    %v213 = vld [vmem:[%s211 + $0x4] sm:$0xf]
    %v214 = vld [vmem:[%s211 + $0x8] sm:$0xf]
    %v215 = vld [vmem:[%s211 + $0xc] sm:$0xf]
    %v216 = vld [vmem:[%s211 + $0x10] sm:$0xf]
    %v217 = vld [vmem:[%s211 + $0x14] sm:$0xf]
    %v218 = vld [vmem:[%s211 + $0x18] sm:$0x1]
    %v226 = vunpack.c.l.b16 %v212
    %v227 = vunpack.c.l.b16 %v213
    %v228 = vunpack.c.l.b16 %v214
    %v229 = vunpack.c.l.b16 %v215
    %v230 = vunpack.c.l.b16 %v216
    %v231 = vunpack.c.l.b16 %v217
    %v232 = vunpack.c.l.b16 %v218
    %v233 = vpack.c.b16 %v227, %v226
    %v234 = vpack.c.b16 %v229, %v228
    %v235 = vpack.c.b16 %v231, %v230
    %v236 = vpack.c.b16 %v232, %v232
    %v241 = vsel %vm183, %v236, 0
    %243 = vmatpush.bf16.msra.mxu0 0
    %244 = vmatpush.bf16.msra.mxu0 0
    %245 = vmatpush.bf16.msra.mxu0 0
    %246 = vmatpush.bf16.msra.mxu0 0
    %247 = vmatpush.bf16.msra.mxu0 %v241
    %248 = vmatpush.bf16.msra.mxu0 %v235
    %249 = vmatpush.bf16.msra.mxu0 %v234
    %250 = vmatpush.bf16.msra.mxu0 %v233
    %251 = vmatmul.bf16.gmra.mxu0 %v175
    %v252 = vpop.f32.mrf.mxu0
    %v253 = vadd.f32 0.0, %v252
    %v254 = vpop.f32.mrf.mxu0
    %v255 = vadd.f32 0.0, %v254
    %256 = vmatmul.bf16.gmra.mxu0 %v178
    %v257 = vpop.f32.mrf.mxu0
    %v258 = vadd.f32 0.0, %v257
    %v259 = vpop.f32.mrf.mxu0
    %v260 = vadd.f32 0.0, %v259
    %261 = vmatmul.bf16.gmra.mxu0 %v181
    %v262 = vpop.f32.mrf.mxu0
    %v263 = vadd.f32 0.0, %v262
    %v264 = vpop.f32.mrf.mxu0
    %v265 = vadd.f32 0.0, %v264
    %266 = vdwg.mxu0
    %s267 = scalar_lea.vmem [#allocation2], 56
    %v268 = vld [vmem:[%s267] sm:$0xf]
    %v269 = vld [vmem:[%s267 + $0x4] sm:$0xf]
    %v270 = vld [vmem:[%s267 + $0x8] sm:$0xf]
    %v271 = vld [vmem:[%s267 + $0xc] sm:$0xf]
    %v272 = vld [vmem:[%s267 + $0x10] sm:$0xf]
    %v273 = vld [vmem:[%s267 + $0x14] sm:$0xf]
    %v274 = vld [vmem:[%s267 + $0x18] sm:$0x1]
    %v282 = vunpack.c.l.b16 %v268
    %v283 = vunpack.c.l.b16 %v269
    %v284 = vunpack.c.l.b16 %v270
    %v285 = vunpack.c.l.b16 %v271
    %v286 = vunpack.c.l.b16 %v272
    %v287 = vunpack.c.l.b16 %v273
    %v288 = vunpack.c.l.b16 %v274
    %v289 = vpack.c.b16 %v283, %v282
    %v290 = vpack.c.b16 %v285, %v284
    %v291 = vpack.c.b16 %v287, %v286
    %v292 = vpack.c.b16 %v288, %v288
    %v297 = vsel %vm183, %v292, 0
    %299 = vmatpush.bf16.msra.mxu0 0
    %300 = vmatpush.bf16.msra.mxu0 0
    %301 = vmatpush.bf16.msra.mxu0 0
    %302 = vmatpush.bf16.msra.mxu0 0
    %303 = vmatpush.bf16.msra.mxu0 %v297
    %304 = vmatpush.bf16.msra.mxu0 %v291
    %305 = vmatpush.bf16.msra.mxu0 %v290
    %306 = vmatpush.bf16.msra.mxu0 %v289
    %307 = vmatmul.bf16.gmra.mxu0 %v175
    %v308 = vpop.f32.mrf.mxu0
    %v309 = vadd.f32 0.0, %v308
    %v310 = vpop.f32.mrf.mxu0
    %v311 = vadd.f32 0.0, %v310
    %312 = vmatmul.bf16.gmra.mxu0 %v178
    %v313 = vpop.f32.mrf.mxu0
    %v314 = vadd.f32 0.0, %v313
    %v315 = vpop.f32.mrf.mxu0
    %v316 = vadd.f32 0.0, %v315
    %317 = vmatmul.bf16.gmra.mxu0 %v181
    %v318 = vpop.f32.mrf.mxu0
    %v319 = vadd.f32 0.0, %v318
    %v320 = vpop.f32.mrf.mxu0
    %v321 = vadd.f32 0.0, %v320
    %322 = vdwg.mxu0
    %v323 = vlaneseq
    %v324 = vshrl.u32 %v323, 7
    %v325 = vadd.s32 %v324, 8
    %v326 = vadd.s32 %v324, 16
    %v327 = vadd.s32 %v324, 24
    %v328 = vadd.s32 %v324, 32
    %v329 = vadd.s32 %v324, 40
    %vm330 = vcmp.lt.s32.totalorder %v324, 0
    %v331 = vsub.s32 0, %v324
    %v332 = vsel %vm330, %v331, %v324
    %v333 = vand.u32 %v332, 65535
    %v334 = vshrl.u32 %v332, 16
    %v336 = vmul.u32 %v333, 43691
    %v337 = vmul.u32 %v333, 43690
    %v338 = vmul.u32 %v334, 43691
    %v339 = vmul.u32 %v334, 43690
    %v340 = vshll.u32 %v337, 16
    %v341 = vshrl.u32 %v337, 16
    %v342 = vshll.u32 %v338, 16
    %v343 = vshrl.u32 %v338, 16
    %vm344 = vc.u32 %v336, %v340
    %v345 = vsel %vm344, 1, 0
    %v346 = vadd.s32 %v336, %v340
    %v347 = vadd.s32 %v339, %v345
    %vm348 = vc.u32 %v346, %v342
    %v349 = vsel %vm348, 1, 0
    %v350 = vadd.s32 %v346, %v342
    %v351 = vadd.s32 %v347, %v349
    %v352 = vadd.s32 %v351, %v341
    %v353 = vadd.s32 %v352, %v343
    %v354 = vshrl.u32 %v353, 4
    %v355 = vmul.u32 %v354, 24
    %v356 = vsub.s32 %v332, %v355
    %v357 = vsub.s32 0, %v356
    %v358 = vsel %vm330, %v357, %v356
    %vm359 = vcmp.lt.s32.totalorder %v325, 0
    %v360 = vsub.s32 0, %v325
    %v361 = vsel %vm359, %v360, %v325
    %v362 = vand.u32 %v361, 65535
    %v363 = vshrl.u32 %v361, 16
    %v365 = vmul.u32 %v362, 43691
    %v366 = vmul.u32 %v362, 43690
    %v367 = vmul.u32 %v363, 43691
    %v368 = vmul.u32 %v363, 43690
    %v369 = vshll.u32 %v366, 16
    %v370 = vshrl.u32 %v366, 16
    %v371 = vshll.u32 %v367, 16
    %v372 = vshrl.u32 %v367, 16
    %vm373 = vc.u32 %v365, %v369
    %v374 = vsel %vm373, 1, 0
    %v375 = vadd.s32 %v365, %v369
    %v376 = vadd.s32 %v368, %v374
    %vm377 = vc.u32 %v375, %v371
    %v378 = vsel %vm377, 1, 0
    %v379 = vadd.s32 %v375, %v371
    %v380 = vadd.s32 %v376, %v378
    %v381 = vadd.s32 %v380, %v370
    %v382 = vadd.s32 %v381, %v372
    %v383 = vshrl.u32 %v382, 4
    %v384 = vmul.u32 %v383, 24
    %v385 = vsub.s32 %v361, %v384
    %v386 = vsub.s32 0, %v385
    %v387 = vsel %vm359, %v386, %v385
    %vm388 = vcmp.lt.s32.totalorder %v326, 0
    %v389 = vsub.s32 0, %v326
    %v390 = vsel %vm388, %v389, %v326
    %v391 = vand.u32 %v390, 65535
    %v392 = vshrl.u32 %v390, 16
    %v394 = vmul.u32 %v391, 43691
    %v395 = vmul.u32 %v391, 43690
    %v396 = vmul.u32 %v392, 43691
    %v397 = vmul.u32 %v392, 43690
    %v398 = vshll.u32 %v395, 16
    %v399 = vshrl.u32 %v395, 16
    %v400 = vshll.u32 %v396, 16
    %v401 = vshrl.u32 %v396, 16
    %vm402 = vc.u32 %v394, %v398
    %v403 = vsel %vm402, 1, 0
    %v404 = vadd.s32 %v394, %v398
    %v405 = vadd.s32 %v397, %v403
    %vm406 = vc.u32 %v404, %v400
    %v407 = vsel %vm406, 1, 0
    %v408 = vadd.s32 %v404, %v400
    %v409 = vadd.s32 %v405, %v407
    %v410 = vadd.s32 %v409, %v399
    %v411 = vadd.s32 %v410, %v401
    %v412 = vshrl.u32 %v411, 4
    %v413 = vmul.u32 %v412, 24
    %v414 = vsub.s32 %v390, %v413
    %v415 = vsub.s32 0, %v414
    %v416 = vsel %vm388, %v415, %v414
    %vm417 = vcmp.lt.s32.totalorder %v327, 0
    %v418 = vsub.s32 0, %v327
    %v419 = vsel %vm417, %v418, %v327
    %v420 = vand.u32 %v419, 65535
    %v421 = vshrl.u32 %v419, 16
    %v423 = vmul.u32 %v420, 43691
    %v424 = vmul.u32 %v420, 43690
    %v425 = vmul.u32 %v421, 43691
    %v426 = vmul.u32 %v421, 43690
    %v427 = vshll.u32 %v424, 16
    %v428 = vshrl.u32 %v424, 16
    %v429 = vshll.u32 %v425, 16
    %v430 = vshrl.u32 %v425, 16
    %vm431 = vc.u32 %v423, %v427
    %v432 = vsel %vm431, 1, 0
    %v433 = vadd.s32 %v423, %v427
    %v434 = vadd.s32 %v426, %v432
    %vm435 = vc.u32 %v433, %v429
    %v436 = vsel %vm435, 1, 0
    %v437 = vadd.s32 %v433, %v429
    %v438 = vadd.s32 %v434, %v436
    %v439 = vadd.s32 %v438, %v428
    %v440 = vadd.s32 %v439, %v430
    %v441 = vshrl.u32 %v440, 4
    %v442 = vmul.u32 %v441, 24
    %v443 = vsub.s32 %v419, %v442
    %v444 = vsub.s32 0, %v443
    %v445 = vsel %vm417, %v444, %v443
    %vm446 = vcmp.lt.s32.totalorder %v328, 0
    %v447 = vsub.s32 0, %v328
    %v448 = vsel %vm446, %v447, %v328
    %v449 = vand.u32 %v448, 65535
    %v450 = vshrl.u32 %v448, 16
    %v452 = vmul.u32 %v449, 43691
    %v453 = vmul.u32 %v449, 43690
    %v454 = vmul.u32 %v450, 43691
    %v455 = vmul.u32 %v450, 43690
    %v456 = vshll.u32 %v453, 16
    %v457 = vshrl.u32 %v453, 16
    %v458 = vshll.u32 %v454, 16
    %v459 = vshrl.u32 %v454, 16
    %vm460 = vc.u32 %v452, %v456
    %v461 = vsel %vm460, 1, 0
    %v462 = vadd.s32 %v452, %v456
    %v463 = vadd.s32 %v455, %v461
    %vm464 = vc.u32 %v462, %v458
    %v465 = vsel %vm464, 1, 0
    %v466 = vadd.s32 %v462, %v458
    %v467 = vadd.s32 %v463, %v465
    %v468 = vadd.s32 %v467, %v457
    %v469 = vadd.s32 %v468, %v459
    %v470 = vshrl.u32 %v469, 4
    %v471 = vmul.u32 %v470, 24
    %v472 = vsub.s32 %v448, %v471
    %v473 = vsub.s32 0, %v472
    %v474 = vsel %vm446, %v473, %v472
    %vm475 = vcmp.lt.s32.totalorder %v329, 0
    %v476 = vsub.s32 0, %v329
    %v477 = vsel %vm475, %v476, %v329
    %v478 = vand.u32 %v477, 65535
    %v479 = vshrl.u32 %v477, 16
    %v481 = vmul.u32 %v478, 43691
    %v482 = vmul.u32 %v478, 43690
    %v483 = vmul.u32 %v479, 43691
    %v484 = vmul.u32 %v479, 43690
    %v485 = vshll.u32 %v482, 16
    %v486 = vshrl.u32 %v482, 16
    %v487 = vshll.u32 %v483, 16
    %v488 = vshrl.u32 %v483, 16
    %vm489 = vc.u32 %v481, %v485
    %v490 = vsel %vm489, 1, 0
    %v491 = vadd.s32 %v481, %v485
    %v492 = vadd.s32 %v484, %v490
    %vm493 = vc.u32 %v491, %v487
    %v494 = vsel %vm493, 1, 0
    %v495 = vadd.s32 %v491, %v487
    %v496 = vadd.s32 %v492, %v494
    %v497 = vadd.s32 %v496, %v486
    %v498 = vadd.s32 %v497, %v488
    %v499 = vshrl.u32 %v498, 4
    %v500 = vmul.u32 %v499, 24
    %v501 = vsub.s32 %v477, %v500
    %v502 = vsub.s32 0, %v501
    %v503 = vsel %vm475, %v502, %v501
    %vm504 = vcmp.ne.s32.totalorder %v358, 0
    %vm505 = vcmp.ne.s32.totalorder %v387, 0
    %vm506 = vcmp.ne.s32.totalorder %v416, 0
    %vm507 = vcmp.ne.s32.totalorder %v445, 0
    %vm508 = vcmp.ne.s32.totalorder %v474, 0
    %vm509 = vcmp.ne.s32.totalorder %v503, 0
    %vm510 = vcmp.lt.s32.totalorder %v358, 0
    %vm511 = vcmp.lt.s32.totalorder %v387, 0
    %vm512 = vcmp.lt.s32.totalorder %v416, 0
    %vm513 = vcmp.lt.s32.totalorder %v445, 0
    %vm514 = vcmp.lt.s32.totalorder %v474, 0
    %vm515 = vcmp.lt.s32.totalorder %v503, 0
    %vm516 = vmand %vm510, %vm504
    %vm517 = vmand %vm511, %vm505
    %vm518 = vmand %vm512, %vm506
    %vm519 = vmand %vm513, %vm507
    %vm520 = vmand %vm514, %vm508
    %vm521 = vmand %vm515, %vm509
    %v522 = vadd.s32 %v358, 24
    %v523 = vadd.s32 %v387, 24
    %v524 = vadd.s32 %v416, 24
    %v525 = vadd.s32 %v445, 24
    %v526 = vadd.s32 %v474, 24
    %v527 = vadd.s32 %v503, 24
    %v528 = vsel %vm516, %v522, %v358
    %v529 = vsel %vm517, %v523, %v387
    %v530 = vsel %vm518, %v524, %v416
    %v531 = vsel %vm519, %v525, %v445
    %v532 = vsel %vm520, %v526, %v474
    %v533 = vsel %vm521, %v527, %v503
    %vm534 = vcmp.gt.s32.totalorder %v528, 0
    %vm535 = vcmp.gt.s32.totalorder %v529, 0
    %vm536 = vcmp.gt.s32.totalorder %v530, 0
    %vm537 = vcmp.gt.s32.totalorder %v531, 0
    %vm538 = vcmp.gt.s32.totalorder %v532, 0
    %vm539 = vcmp.gt.s32.totalorder %v533, 0
    %v540 = vrot.slane %v197, 7
    %v541 = vrot.slane %v199, 7
    %v542 = vrot.slane %v202, 7
    %v543 = vrot.slane %v204, 7
    %v544 = vrot.slane %v207, 7
    %v545 = vrot.slane %v209, 7
    %vm546 = vcmp.lt.s32.totalorder %v324, 1
    %v547 = vsel %vm546, %v544, %v545
    %v548 = vsel %vm546, %v543, %v544
    %v549 = vsel %vm546, %v542, %v543
    %v550 = vsel %vm546, %v541, %v542
    %v551 = vsel %vm546, %v540, %v541
    %v552 = vsel %vm546, %v545, %v540
    %v553 = vsel %vm534, 1, 0
    %v554 = vsel %vm535, 1, 0
    %v555 = vsel %vm536, 1, 0
    %v556 = vsel %vm537, 1, 0
    %v557 = vsel %vm538, 1, 0
    %v558 = vsel %vm539, 1, 0
    %vm559 = vcmp.eq.s32.totalorder %v553, 1
    %vm560 = vcmp.eq.s32.totalorder %v554, 1
    %vm561 = vcmp.eq.s32.totalorder %v555, 1
    %vm562 = vcmp.eq.s32.totalorder %v556, 1
    %vm563 = vcmp.eq.s32.totalorder %v557, 1
    %vm564 = vcmp.eq.s32.totalorder %v558, 1
    %v565 = vsel %vm559, %v552, 0.0
    %v566 = vsel %vm560, %v551, 0.0
    %v567 = vsel %vm561, %v550, 0.0
    %v568 = vsel %vm562, %v549, 0.0
    %v569 = vsel %vm563, %v548, 0.0
    %v570 = vsel %vm564, %v547, 0.0
    %vm571 = vcmp.lt.s32.totalorder %v528, 23
    %vm572 = vcmp.lt.s32.totalorder %v529, 23
    %vm573 = vcmp.lt.s32.totalorder %v530, 23
    %vm574 = vcmp.lt.s32.totalorder %v531, 23
    %vm575 = vcmp.lt.s32.totalorder %v532, 23
    %vm576 = vcmp.lt.s32.totalorder %v533, 23
    %v577 = vrot.slane %v309, 1
    %v578 = vrot.slane %v311, 1
    %v579 = vrot.slane %v314, 1
    %v580 = vrot.slane %v316, 1
    %v581 = vrot.slane %v319, 1
    %v582 = vrot.slane %v321, 1
    %vm583 = vcmp.lt.s32.totalorder %v324, 7
    %v584 = vsel %vm583, %v581, %v582
    %v585 = vsel %vm583, %v580, %v581
    %v586 = vsel %vm583, %v579, %v580
    %v587 = vsel %vm583, %v578, %v579
    %v588 = vsel %vm583, %v577, %v578
    %v589 = vsel %vm583, %v582, %v577
    %v590 = vsel %vm571, 1, 0
    %v591 = vsel %vm572, 1, 0
    %v592 = vsel %vm573, 1, 0
    %v593 = vsel %vm574, 1, 0
    %v594 = vsel %vm575, 1, 0
    %v595 = vsel %vm576, 1, 0
    %vm596 = vcmp.eq.s32.totalorder %v590, 1
    %vm597 = vcmp.eq.s32.totalorder %v591, 1
    %vm598 = vcmp.eq.s32.totalorder %v592, 1
    %vm599 = vcmp.eq.s32.totalorder %v593, 1
    %vm600 = vcmp.eq.s32.totalorder %v594, 1
    %vm601 = vcmp.eq.s32.totalorder %v595, 1
    %v602 = vsel %vm596, %v588, 0.0
    %v603 = vsel %vm597, %v587, 0.0
    %v604 = vsel %vm598, %v586, 0.0
    %v605 = vsel %vm599, %v585, 0.0
    %v606 = vsel %vm600, %v584, 0.0
    %v607 = vsel %vm601, %v589, 0.0
    %v608 = vadd.f32 %v565, %v253
    %v609 = vadd.f32 %v566, %v255
    %v610 = vadd.f32 %v567, %v258
    %v611 = vadd.f32 %v568, %v260
    %v612 = vadd.f32 %v569, %v263
    %v613 = vadd.f32 %v570, %v265
    %v614 = vadd.f32 %v608, %v602
    %v615 = vadd.f32 %v609, %v603
    %v616 = vadd.f32 %v610, %v604
    %v617 = vadd.f32 %v611, %v605
    %v618 = vadd.f32 %v612, %v606
    %v619 = vadd.f32 %v613, %v607
    %v621 = vperm.slane %v144, 0
    %v623 = vadd.f32 %v614, %v621
    %v624 = vadd.f32 %v615, %v621
    %v625 = vadd.f32 %v616, %v621
    %v626 = vadd.f32 %v617, %v621
    %v627 = vadd.f32 %v618, %v621
    %v628 = vadd.f32 %v619, %v621
    %v629 = vmax.f32 %v623, 0.0
    %v630 = vmax.f32 %v624, 0.0
    %v631 = vmax.f32 %v625, 0.0
    %v632 = vmax.f32 %v626, 0.0
    %v633 = vmax.f32 %v627, 0.0
    %v634 = vmax.f32 %v628, 0.0
    %v641 = vrot.slane %v629, 1
    %v642 = vrot.slane %v629, 2
    %v643 = vrot.slane %v629, 3
    %v644 = vrot.slane %v629, 4
    %v645 = vrot.slane %v629, 5
    %v646 = vrot.slane %v629, 6
    %v647 = vrot.slane %v629, 7
    %v648 = vrot.slane %v630, 1
    %v649 = vrot.slane %v630, 2
    %v650 = vrot.slane %v630, 3
    %v651 = vrot.slane %v630, 4
    %v652 = vrot.slane %v630, 5
    %v653 = vrot.slane %v630, 6
    %v654 = vrot.slane %v630, 7
    %v655 = vrot.slane %v631, 1
    %v656 = vrot.slane %v631, 2
    %v657 = vrot.slane %v631, 3
    %v658 = vrot.slane %v631, 4
    %v659 = vrot.slane %v631, 5
    %v660 = vrot.slane %v631, 6
    %v661 = vrot.slane %v631, 7
    %v662 = vrot.slane %v632, 1
    %v663 = vrot.slane %v632, 2
    %v664 = vrot.slane %v632, 3
    %v665 = vrot.slane %v632, 4
    %v666 = vrot.slane %v632, 5
    %v667 = vrot.slane %v632, 6
    %v668 = vrot.slane %v632, 7
    %v669 = vrot.slane %v633, 1
    %v670 = vrot.slane %v633, 2
    %v671 = vrot.slane %v633, 3
    %v672 = vrot.slane %v633, 4
    %v673 = vrot.slane %v633, 5
    %v674 = vrot.slane %v633, 6
    %v675 = vrot.slane %v633, 7
    %v676 = vrot.slane %v634, 1
    %v677 = vrot.slane %v634, 2
    %v678 = vrot.slane %v634, 3
    %v679 = vrot.slane %v634, 4
    %v680 = vrot.slane %v634, 5
    %v681 = vrot.slane %v634, 6
    %v682 = vrot.slane %v634, 7
    %683 = vst [vmem:[#allocation1] ss:$9 sm:$0xff] %v629
    %s684 = scalar_lea.vmem [#allocation1], 1
    %685 = vst [vmem:[%s684] ss:$9 sm:$0xff] %v641
    %s686 = scalar_lea.vmem [#allocation1], 2
    %687 = vst [vmem:[%s686] ss:$9 sm:$0xff] %v642
    %v688 = vld [vmem:[#allocation1] sm:$0xff]
    %689 = vst [vmem:[#allocation1] ss:$9 sm:$0xff] %v643
    %690 = vst [vmem:[%s684] ss:$9 sm:$0xff] %v644
    %691 = vst [vmem:[%s686] ss:$9 sm:$0xff] %v645
    %v692 = vld [vmem:[#allocation1] sm:$0xff]
    %693 = vst [vmem:[#allocation1] ss:$9 sm:$0xff] %v646
    %694 = vst [vmem:[%s684] ss:$9 sm:$0xff] %v647
    %695 = vst [vmem:[%s686] ss:$9 sm:$0xff] %v630
    %v696 = vld [vmem:[#allocation1] sm:$0xff]
    %697 = vst [vmem:[#allocation1] ss:$9 sm:$0xff] %v648
    %698 = vst [vmem:[%s684] ss:$9 sm:$0xff] %v649
    %699 = vst [vmem:[%s686] ss:$9 sm:$0xff] %v650
    %v700 = vld [vmem:[#allocation1] sm:$0xff]
    %701 = vst [vmem:[#allocation1] ss:$9 sm:$0xff] %v651
    %702 = vst [vmem:[%s684] ss:$9 sm:$0xff] %v652
    %703 = vst [vmem:[%s686] ss:$9 sm:$0xff] %v653
    %v704 = vld [vmem:[#allocation1] sm:$0xff]
    %705 = vst [vmem:[#allocation1] ss:$9 sm:$0xff] %v654
    %706 = vst [vmem:[%s684] ss:$9 sm:$0xff] %v631
    %707 = vst [vmem:[%s686] ss:$9 sm:$0xff] %v655
    %v708 = vld [vmem:[#allocation1] sm:$0xff]
    %709 = vst [vmem:[#allocation1] ss:$9 sm:$0xff] %v656
    %710 = vst [vmem:[%s684] ss:$9 sm:$0xff] %v657
    %711 = vst [vmem:[%s686] ss:$9 sm:$0xff] %v658
    %v712 = vld [vmem:[#allocation1] sm:$0xff]
    %713 = vst [vmem:[#allocation1] ss:$9 sm:$0xff] %v659
    %714 = vst [vmem:[%s684] ss:$9 sm:$0xff] %v660
    %715 = vst [vmem:[%s686] ss:$9 sm:$0xff] %v661
    %v716 = vld [vmem:[#allocation1] sm:$0xff]
    %717 = vst [vmem:[#allocation1] ss:$9 sm:$0xff] %v632
    %718 = vst [vmem:[%s684] ss:$9 sm:$0xff] %v662
    %719 = vst [vmem:[%s686] ss:$9 sm:$0xff] %v663
    %v720 = vld [vmem:[#allocation1] sm:$0xff]
    %721 = vst [vmem:[#allocation1] ss:$9 sm:$0xff] %v664
    %722 = vst [vmem:[%s684] ss:$9 sm:$0xff] %v665
    %723 = vst [vmem:[%s686] ss:$9 sm:$0xff] %v666
    %v724 = vld [vmem:[#allocation1] sm:$0xff]
    %725 = vst [vmem:[#allocation1] ss:$9 sm:$0xff] %v667
    %726 = vst [vmem:[%s684] ss:$9 sm:$0xff] %v668
    %727 = vst [vmem:[%s686] ss:$9 sm:$0xff] %v633
    %v728 = vld [vmem:[#allocation1] sm:$0xff]
    %729 = vst [vmem:[#allocation1] ss:$9 sm:$0xff] %v669
    %730 = vst [vmem:[%s684] ss:$9 sm:$0xff] %v670
    %731 = vst [vmem:[%s686] ss:$9 sm:$0xff] %v671
    %v732 = vld [vmem:[#allocation1] sm:$0xff]
    %733 = vst [vmem:[#allocation1] ss:$9 sm:$0xff] %v672
    %734 = vst [vmem:[%s684] ss:$9 sm:$0xff] %v673
    %735 = vst [vmem:[%s686] ss:$9 sm:$0xff] %v674
    %v736 = vld [vmem:[#allocation1] sm:$0xff]
    %737 = vst [vmem:[#allocation1] ss:$9 sm:$0xff] %v675
    %738 = vst [vmem:[%s684] ss:$9 sm:$0xff] %v634
    %739 = vst [vmem:[%s686] ss:$9 sm:$0xff] %v676
    %v740 = vld [vmem:[#allocation1] sm:$0xff]
    %741 = vst [vmem:[#allocation1] ss:$9 sm:$0xff] %v677
    %742 = vst [vmem:[%s684] ss:$9 sm:$0xff] %v678
    %743 = vst [vmem:[%s686] ss:$9 sm:$0xff] %v679
    %v744 = vld [vmem:[#allocation1] sm:$0xff]
    %745 = vst [vmem:[#allocation1] ss:$9 sm:$0xff] %v680
    %746 = vst [vmem:[%s684] ss:$9 sm:$0xff] %v681
    %747 = vst [vmem:[%s686] ss:$9 sm:$0xff] %v682
    %v748 = vld [vmem:[#allocation1] sm:$0xff]
    %vm765 = vcmask 1042432
    %v766 = vsel %vm765, %v688, -inf
    %v767 = vrot.slane %v766, 4
    %v768 = vmax.f32 %v766, %v767
    %v769 = vrot.slane %v768, 2
    %v770 = vmax.f32 %v768, %v769
    %v771 = vrot.slane %v770, 1
    %v772 = vmax.f32 %v770, %v771
    %v773 = vsel %vm765, %v692, -inf
    %v774 = vrot.slane %v773, 4
    %v775 = vmax.f32 %v773, %v774
    %v776 = vrot.slane %v775, 2
    %v777 = vmax.f32 %v775, %v776
    %v778 = vrot.slane %v777, 1
    %v779 = vmax.f32 %v777, %v778
    %v780 = vsel %vm765, %v696, -inf
    %v781 = vrot.slane %v780, 4
    %v782 = vmax.f32 %v780, %v781
    %v783 = vrot.slane %v782, 2
    %v784 = vmax.f32 %v782, %v783
    %v785 = vrot.slane %v784, 1
    %v786 = vmax.f32 %v784, %v785
    %v787 = vsel %vm765, %v700, -inf
    %v788 = vrot.slane %v787, 4
    %v789 = vmax.f32 %v787, %v788
    %v790 = vrot.slane %v789, 2
    %v791 = vmax.f32 %v789, %v790
    %v792 = vrot.slane %v791, 1
    %v793 = vmax.f32 %v791, %v792
    %v794 = vsel %vm765, %v704, -inf
    %v795 = vrot.slane %v794, 4
    %v796 = vmax.f32 %v794, %v795
    %v797 = vrot.slane %v796, 2
    %v798 = vmax.f32 %v796, %v797
    %v799 = vrot.slane %v798, 1
    %v800 = vmax.f32 %v798, %v799
    %v801 = vsel %vm765, %v708, -inf
    %v802 = vrot.slane %v801, 4
    %v803 = vmax.f32 %v801, %v802
    %v804 = vrot.slane %v803, 2
    %v805 = vmax.f32 %v803, %v804
    %v806 = vrot.slane %v805, 1
    %v807 = vmax.f32 %v805, %v806
    %v808 = vsel %vm765, %v712, -inf
    %v809 = vrot.slane %v808, 4
    %v810 = vmax.f32 %v808, %v809
    %v811 = vrot.slane %v810, 2
    %v812 = vmax.f32 %v810, %v811
    %v813 = vrot.slane %v812, 1
    %v814 = vmax.f32 %v812, %v813
    %v815 = vsel %vm765, %v716, -inf
    %v816 = vrot.slane %v815, 4
    %v817 = vmax.f32 %v815, %v816
    %v818 = vrot.slane %v817, 2
    %v819 = vmax.f32 %v817, %v818
    %v820 = vrot.slane %v819, 1
    %v821 = vmax.f32 %v819, %v820
    %v822 = vsel %vm765, %v720, -inf
    %v823 = vrot.slane %v822, 4
    %v824 = vmax.f32 %v822, %v823
    %v825 = vrot.slane %v824, 2
    %v826 = vmax.f32 %v824, %v825
    %v827 = vrot.slane %v826, 1
    %v828 = vmax.f32 %v826, %v827
    %v829 = vsel %vm765, %v724, -inf
    %v830 = vrot.slane %v829, 4
    %v831 = vmax.f32 %v829, %v830
    %v832 = vrot.slane %v831, 2
    %v833 = vmax.f32 %v831, %v832
    %v834 = vrot.slane %v833, 1
    %v835 = vmax.f32 %v833, %v834
    %v836 = vsel %vm765, %v728, -inf
    %v837 = vrot.slane %v836, 4
    %v838 = vmax.f32 %v836, %v837
    %v839 = vrot.slane %v838, 2
    %v840 = vmax.f32 %v838, %v839
    %v841 = vrot.slane %v840, 1
    %v842 = vmax.f32 %v840, %v841
    %v843 = vsel %vm765, %v732, -inf
    %v844 = vrot.slane %v843, 4
    %v845 = vmax.f32 %v843, %v844
    %v846 = vrot.slane %v845, 2
    %v847 = vmax.f32 %v845, %v846
    %v848 = vrot.slane %v847, 1
    %v849 = vmax.f32 %v847, %v848
    %v850 = vsel %vm765, %v736, -inf
    %v851 = vrot.slane %v850, 4
    %v852 = vmax.f32 %v850, %v851
    %v853 = vrot.slane %v852, 2
    %v854 = vmax.f32 %v852, %v853
    %v855 = vrot.slane %v854, 1
    %v856 = vmax.f32 %v854, %v855
    %v857 = vsel %vm765, %v740, -inf
    %v858 = vrot.slane %v857, 4
    %v859 = vmax.f32 %v857, %v858
    %v860 = vrot.slane %v859, 2
    %v861 = vmax.f32 %v859, %v860
    %v862 = vrot.slane %v861, 1
    %v863 = vmax.f32 %v861, %v862
    %v864 = vsel %vm765, %v744, -inf
    %v865 = vrot.slane %v864, 4
    %v866 = vmax.f32 %v864, %v865
    %v867 = vrot.slane %v866, 2
    %v868 = vmax.f32 %v866, %v867
    %v869 = vrot.slane %v868, 1
    %v870 = vmax.f32 %v868, %v869
    %v871 = vsel %vm765, %v748, -inf
    %v872 = vrot.slane %v871, 4
    %v873 = vmax.f32 %v871, %v872
    %v874 = vrot.slane %v873, 2
    %v875 = vmax.f32 %v873, %v874
    %v876 = vrot.slane %v875, 1
    %v877 = vmax.f32 %v875, %v876
    %v878 = vpack.c.bf16 %v772, %v772
    %v879 = vpack.c.bf16 %v779, %v779
    %v880 = vpack.c.bf16 %v786, %v786
    %v881 = vpack.c.bf16 %v793, %v793
    %v882 = vpack.c.bf16 %v800, %v800
    %v883 = vpack.c.bf16 %v807, %v807
    %v884 = vpack.c.bf16 %v814, %v814
    %v885 = vpack.c.bf16 %v821, %v821
    %v886 = vpack.c.bf16 %v828, %v828
    %v887 = vpack.c.bf16 %v835, %v835
    %v888 = vpack.c.bf16 %v842, %v842
    %v889 = vpack.c.bf16 %v849, %v849
    %v890 = vpack.c.bf16 %v856, %v856
    %v891 = vpack.c.bf16 %v863, %v863
    %v892 = vpack.c.bf16 %v870, %v870
    %v893 = vpack.c.bf16 %v877, %v877
    %v894 = vld [vmem:[%s4] sm:$0x1]
    %v895 = vld [vmem:[#allocation5] sm:$0xf]
    %v896 = vld [vmem:[#allocation5 + $0x4] sm:$0xf]
    %v897 = vld [vmem:[#allocation5 + $0x8] sm:$0xf]
    %v898 = vld [vmem:[#allocation5 + $0xc] sm:$0xf]
    %v899 = vld [vmem:[#allocation5 + $0x10] sm:$0xf]
    %v900 = vld [vmem:[#allocation5 + $0x14] sm:$0xf]
    %v901 = vld [vmem:[#allocation5 + $0x18] sm:$0xf]
    %v902 = vld [vmem:[#allocation5 + $0x1c] sm:$0xf]
    %v903 = vld [vmem:[#allocation5 + $0x20] sm:$0xf]
    %v904 = vld [vmem:[#allocation5 + $0x24] sm:$0xf]
    %v905 = vld [vmem:[#allocation5 + $0x28] sm:$0xf]
    %v906 = vld [vmem:[#allocation5 + $0x2c] sm:$0xf]
    %v907 = vld [vmem:[#allocation5 + $0x30] sm:$0xf]
    %v908 = vld [vmem:[#allocation5 + $0x34] sm:$0xf]
    %v909 = vld [vmem:[#allocation5 + $0x38] sm:$0xf]
    %v910 = vld [vmem:[#allocation5 + $0x3c] sm:$0xf]
    %v927 = vunpack.c.l.b16 %v878
    %v928 = vunpack.c.l.b16 %v879
    %v929 = vunpack.c.l.b16 %v880
    %v930 = vunpack.c.l.b16 %v881
    %v931 = vunpack.c.l.b16 %v882
    %v932 = vunpack.c.l.b16 %v883
    %v933 = vunpack.c.l.b16 %v884
    %v934 = vunpack.c.l.b16 %v885
    %v935 = vunpack.c.l.b16 %v886
    %v936 = vunpack.c.l.b16 %v887
    %v937 = vunpack.c.l.b16 %v888
    %v938 = vunpack.c.l.b16 %v889
    %v939 = vunpack.c.l.b16 %v890
    %v940 = vunpack.c.l.b16 %v891
    %v941 = vunpack.c.l.b16 %v892
    %v942 = vunpack.c.l.b16 %v893
    %vm943 = vcmask 1041409
    %v944 = vsel %vm943, %v928, %v927
    %vm945 = vcmask 1042434
    %v946 = vsel %vm945, %v929, %v944
    %vm947 = vcmask 1043459
    %v948 = vsel %vm947, %v930, %v946
    %vm949 = vcmask 1044484
    %v950 = vsel %vm949, %v931, %v948
    %vm951 = vcmask 1045509
    %v952 = vsel %vm951, %v932, %v950
    %vm953 = vcmask 1046534
    %v954 = vsel %vm953, %v933, %v952
    %vm955 = vcmask 1047559
    %v956 = vsel %vm955, %v934, %v954
    %v957 = vsel %vm943, %v936, %v935
    %v958 = vsel %vm945, %v937, %v957
    %v959 = vsel %vm947, %v938, %v958
    %v960 = vsel %vm949, %v939, %v959
    %v961 = vsel %vm951, %v940, %v960
    %v962 = vsel %vm953, %v941, %v961
    %v963 = vsel %vm955, %v942, %v962
    %v964 = vpack.c.b16 %v963, %v956
    %v982 = vunpack.c.l.b16 %v895
    %v983 = vunpack.c.l.b16 %v896
    %v984 = vunpack.c.l.b16 %v897
    %v985 = vunpack.c.l.b16 %v898
    %v986 = vunpack.c.l.b16 %v899
    %v987 = vunpack.c.l.b16 %v900
    %v988 = vunpack.c.l.b16 %v901
    %v989 = vunpack.c.l.b16 %v902
    %v990 = vunpack.c.l.b16 %v903
    %v991 = vunpack.c.l.b16 %v904
    %v992 = vunpack.c.l.b16 %v905
    %v993 = vunpack.c.l.b16 %v906
    %v994 = vunpack.c.l.b16 %v907
    %v995 = vunpack.c.l.b16 %v908
    %v996 = vunpack.c.l.b16 %v909
    %v997 = vunpack.c.l.b16 %v910
    %v998 = vpack.c.b16 %v983, %v982
    %v999 = vpack.c.b16 %v985, %v984
    %v1000 = vpack.c.b16 %v987, %v986
    %v1001 = vpack.c.b16 %v989, %v988
    %v1002 = vpack.c.b16 %v991, %v990
    %v1003 = vpack.c.b16 %v993, %v992
    %v1004 = vpack.c.b16 %v995, %v994
    %v1005 = vpack.c.b16 %v997, %v996
    %1014 = vmatpush.bf16.msra.mxu0 %v1005
    %1015 = vmatpush.bf16.msra.mxu0 %v1004
    %1016 = vmatpush.bf16.msra.mxu0 %v1003
    %1017 = vmatpush.bf16.msra.mxu0 %v1002
    %1018 = vmatpush.bf16.msra.mxu0 %v1001
    %1019 = vmatpush.bf16.msra.mxu0 %v1000
    %1020 = vmatpush.bf16.msra.mxu0 %v999
    %1021 = vmatpush.bf16.msra.mxu0 %v998
    %1022 = vmatmul.bf16.gmra.mxu0 %v964
    %v1023 = vpop.f32.mrf.mxu0
    %v1024 = vadd.f32 0.0, %v1023
    %v1025 = vpop.f32.mrf.mxu0
    %v1026 = vadd.f32 0.0, %v1025
    %1027 = vdwg.mxu0
    %s1028 = scalar_lea.vmem [#allocation5], 64
    %v1029 = vld [vmem:[%s1028] sm:$0xf]
    %v1030 = vld [vmem:[%s1028 + $0x4] sm:$0xf]
    %v1031 = vld [vmem:[%s1028 + $0x8] sm:$0xf]
    %v1032 = vld [vmem:[%s1028 + $0xc] sm:$0xf]
    %v1033 = vld [vmem:[%s1028 + $0x10] sm:$0xf]
    %v1034 = vld [vmem:[%s1028 + $0x14] sm:$0xf]
    %v1035 = vld [vmem:[%s1028 + $0x18] sm:$0xf]
    %v1036 = vld [vmem:[%s1028 + $0x1c] sm:$0xf]
    %v1037 = vld [vmem:[%s1028 + $0x20] sm:$0xf]
    %v1038 = vld [vmem:[%s1028 + $0x24] sm:$0xf]
    %v1039 = vld [vmem:[%s1028 + $0x28] sm:$0xf]
    %v1040 = vld [vmem:[%s1028 + $0x2c] sm:$0xf]
    %v1041 = vld [vmem:[%s1028 + $0x30] sm:$0xf]
    %v1042 = vld [vmem:[%s1028 + $0x34] sm:$0xf]
    %v1043 = vld [vmem:[%s1028 + $0x38] sm:$0xf]
    %v1044 = vld [vmem:[%s1028 + $0x3c] sm:$0xf]
    %v1061 = vunpack.c.l.b16 %v1029
    %v1062 = vunpack.c.l.b16 %v1030
    %v1063 = vunpack.c.l.b16 %v1031
    %v1064 = vunpack.c.l.b16 %v1032
    %v1065 = vunpack.c.l.b16 %v1033
    %v1066 = vunpack.c.l.b16 %v1034
    %v1067 = vunpack.c.l.b16 %v1035
    %v1068 = vunpack.c.l.b16 %v1036
    %v1069 = vunpack.c.l.b16 %v1037
    %v1070 = vunpack.c.l.b16 %v1038
    %v1071 = vunpack.c.l.b16 %v1039
    %v1072 = vunpack.c.l.b16 %v1040
    %v1073 = vunpack.c.l.b16 %v1041
    %v1074 = vunpack.c.l.b16 %v1042
    %v1075 = vunpack.c.l.b16 %v1043
    %v1076 = vunpack.c.l.b16 %v1044
    %v1077 = vpack.c.b16 %v1062, %v1061
    %v1078 = vpack.c.b16 %v1064, %v1063
    %v1079 = vpack.c.b16 %v1066, %v1065
    %v1080 = vpack.c.b16 %v1068, %v1067
    %v1081 = vpack.c.b16 %v1070, %v1069
    %v1082 = vpack.c.b16 %v1072, %v1071
    %v1083 = vpack.c.b16 %v1074, %v1073
    %v1084 = vpack.c.b16 %v1076, %v1075
    %1093 = vmatpush.bf16.msra.mxu0 %v1084
    %1094 = vmatpush.bf16.msra.mxu0 %v1083
    %1095 = vmatpush.bf16.msra.mxu0 %v1082
    %1096 = vmatpush.bf16.msra.mxu0 %v1081
    %1097 = vmatpush.bf16.msra.mxu0 %v1080
    %1098 = vmatpush.bf16.msra.mxu0 %v1079
    %1099 = vmatpush.bf16.msra.mxu0 %v1078
    %1100 = vmatpush.bf16.msra.mxu0 %v1077
    %1101 = vmatmul.bf16.gmra.mxu0 %v964
    %v1102 = vpop.f32.mrf.mxu0
    %v1103 = vadd.f32 0.0, %v1102
    %v1104 = vpop.f32.mrf.mxu0
    %v1105 = vadd.f32 0.0, %v1104
    %1106 = vdwg.mxu0
    %s1107 = scalar_lea.vmem [#allocation5], 128
    %v1108 = vld [vmem:[%s1107] sm:$0xf]
    %v1109 = vld [vmem:[%s1107 + $0x4] sm:$0xf]
    %v1110 = vld [vmem:[%s1107 + $0x8] sm:$0xf]
    %v1111 = vld [vmem:[%s1107 + $0xc] sm:$0xf]
    %v1112 = vld [vmem:[%s1107 + $0x10] sm:$0xf]
    %v1113 = vld [vmem:[%s1107 + $0x14] sm:$0xf]
    %v1114 = vld [vmem:[%s1107 + $0x18] sm:$0xf]
    %v1115 = vld [vmem:[%s1107 + $0x1c] sm:$0xf]
    %v1116 = vld [vmem:[%s1107 + $0x20] sm:$0xf]
    %v1117 = vld [vmem:[%s1107 + $0x24] sm:$0xf]
    %v1118 = vld [vmem:[%s1107 + $0x28] sm:$0xf]
    %v1119 = vld [vmem:[%s1107 + $0x2c] sm:$0xf]
    %v1120 = vld [vmem:[%s1107 + $0x30] sm:$0xf]
    %v1121 = vld [vmem:[%s1107 + $0x34] sm:$0xf]
    %v1122 = vld [vmem:[%s1107 + $0x38] sm:$0xf]
    %v1123 = vld [vmem:[%s1107 + $0x3c] sm:$0xf]
    %v1140 = vunpack.c.l.b16 %v1108
    %v1141 = vunpack.c.l.b16 %v1109
    %v1142 = vunpack.c.l.b16 %v1110
    %v1143 = vunpack.c.l.b16 %v1111
    %v1144 = vunpack.c.l.b16 %v1112
    %v1145 = vunpack.c.l.b16 %v1113
    %v1146 = vunpack.c.l.b16 %v1114
    %v1147 = vunpack.c.l.b16 %v1115
    %v1148 = vunpack.c.l.b16 %v1116
    %v1149 = vunpack.c.l.b16 %v1117
    %v1150 = vunpack.c.l.b16 %v1118
    %v1151 = vunpack.c.l.b16 %v1119
    %v1152 = vunpack.c.l.b16 %v1120
    %v1153 = vunpack.c.l.b16 %v1121
    %v1154 = vunpack.c.l.b16 %v1122
    %v1155 = vunpack.c.l.b16 %v1123
    %v1156 = vpack.c.b16 %v1141, %v1140
    %v1157 = vpack.c.b16 %v1143, %v1142
    %v1158 = vpack.c.b16 %v1145, %v1144
    %v1159 = vpack.c.b16 %v1147, %v1146
    %v1160 = vpack.c.b16 %v1149, %v1148
    %v1161 = vpack.c.b16 %v1151, %v1150
    %v1162 = vpack.c.b16 %v1153, %v1152
    %v1163 = vpack.c.b16 %v1155, %v1154
    %1172 = vmatpush.bf16.msra.mxu0 %v1163
    %1173 = vmatpush.bf16.msra.mxu0 %v1162
    %1174 = vmatpush.bf16.msra.mxu0 %v1161
    %1175 = vmatpush.bf16.msra.mxu0 %v1160
    %1176 = vmatpush.bf16.msra.mxu0 %v1159
    %1177 = vmatpush.bf16.msra.mxu0 %v1158
    %1178 = vmatpush.bf16.msra.mxu0 %v1157
    %1179 = vmatpush.bf16.msra.mxu0 %v1156
    %1180 = vmatmul.bf16.gmra.mxu0 %v964
    %v1181 = vpop.f32.mrf.mxu0
    %v1182 = vadd.f32 0.0, %v1181
    %v1183 = vpop.f32.mrf.mxu0
    %v1184 = vadd.f32 0.0, %v1183
    %1185 = vdwg.mxu0
    %vm1186 = vcmp.lt.s32.totalorder %v324, 0
    %v1187 = vsub.s32 0, %v324
    %v1188 = vsel %vm1186, %v1187, %v324
    %v1189 = vshrl.u32 %v1188, 3
    %v1190 = vand.u32 %v1188, 7
    %v1191 = vsub.s32 0, %v1190
    %v1192 = vsel %vm1186, %v1191, %v1190
    %vm1193 = vcmp.lt.s32.totalorder %v325, 0
    %v1194 = vsub.s32 0, %v325
    %v1195 = vsel %vm1193, %v1194, %v325
    %v1196 = vshrl.u32 %v1195, 3
    %v1197 = vand.u32 %v1195, 7
    %v1198 = vsub.s32 0, %v1197
    %v1199 = vsel %vm1193, %v1198, %v1197
    %vm1200 = vcmp.ne.s32.totalorder %v1192, 0
    %vm1201 = vcmp.ne.s32.totalorder %v1199, 0
    %vm1202 = vcmp.lt.s32.totalorder %v1192, 0
    %vm1203 = vcmp.lt.s32.totalorder %v1199, 0
    %vm1204 = vmand %vm1202, %vm1200
    %vm1205 = vmand %vm1203, %vm1201
    %v1206 = vadd.s32 %v1192, 8
    %v1207 = vadd.s32 %v1199, 8
    %v1208 = vsel %vm1204, %v1206, %v1192
    %v1209 = vsel %vm1205, %v1207, %v1199
    %vm1210 = vcmp.gt.s32.totalorder %v1208, 0
    %vm1211 = vcmp.gt.s32.totalorder %v1209, 0
    %v1212 = vrot.slane %v1024, 7
    %v1213 = vrot.slane %v1026, 7
    %v1214 = vsel %vm546, %v1212, %v1213
    %v1215 = vsel %vm546, %v1213, %v1212
    %v1216 = vsel %vm1210, 1, 0
    %v1217 = vsel %vm1211, 1, 0
    %vm1218 = vcmp.eq.s32.totalorder %v1216, 1
    %vm1219 = vcmp.eq.s32.totalorder %v1217, 1
    %v1220 = vsel %vm1218, %v1215, 0.0
    %v1221 = vsel %vm1219, %v1214, 0.0
    %vm1222 = vcmp.lt.s32.totalorder %v1208, 7
    %vm1223 = vcmp.lt.s32.totalorder %v1209, 7
    %v1224 = vrot.slane %v1182, 1
    %v1225 = vrot.slane %v1184, 1
    %v1226 = vsel %vm583, %v1224, %v1225
    %v1227 = vsel %vm583, %v1225, %v1224
    %v1228 = vsel %vm1222, 1, 0
    %v1229 = vsel %vm1223, 1, 0
    %vm1230 = vcmp.eq.s32.totalorder %v1228, 1
    %vm1231 = vcmp.eq.s32.totalorder %v1229, 1
    %v1232 = vsel %vm1230, %v1226, 0.0
    %v1233 = vsel %vm1231, %v1227, 0.0
    %v1234 = vadd.f32 %v1220, %v1103
    %v1235 = vadd.f32 %v1221, %v1105
    %v1236 = vadd.f32 %v1234, %v1232
    %v1237 = vadd.f32 %v1235, %v1233
    %v1239 = vperm.slane %v894, 0
    %v1241 = vadd.f32 %v1236, %v1239
    %v1242 = vadd.f32 %v1237, %v1239
    %v1243 = vmax.f32 %v1241, 0.0
    %v1244 = vmax.f32 %v1242, 0.0
    %v1245 = vrot.slane %v1243, 4
    %v1246 = vmax.f32 %v1243, %v1245
    %v1247 = vrot.slane %v1246, 2
    %v1248 = vmax.f32 %v1246, %v1247
    %v1249 = vrot.slane %v1248, 1
    %v1250 = vmax.f32 %v1248, %v1249
    %v1251 = vrot.slane %v1244, 4
    %v1252 = vmax.f32 %v1244, %v1251
    %v1253 = vrot.slane %v1252, 2
    %v1254 = vmax.f32 %v1252, %v1253
    %v1255 = vrot.slane %v1254, 1
    %v1256 = vmax.f32 %v1254, %v1255
    %v1257 = vpack.c.bf16 %v1250, %v1250
    %v1258 = vpack.c.bf16 %v1256, %v1256
    %v1259 = vld [vmem:[#allocation7] sm:$0xf]
    %v1260 = vld [vmem:[#allocation7 + $0x4] sm:$0xf]
    %v1261 = vld [vmem:[#allocation7 + $0x8] sm:$0xf]
    %v1262 = vld [vmem:[#allocation7 + $0xc] sm:$0xf]
    %v1263 = vld [vmem:[#allocation7 + $0x10] sm:$0xf]
    %v1264 = vld [vmem:[#allocation7 + $0x14] sm:$0xf]
    %v1265 = vld [vmem:[#allocation7 + $0x18] sm:$0xf]
    %v1266 = vld [vmem:[#allocation7 + $0x1c] sm:$0xf]
    %v1267 = vld [vmem:[#allocation7 + $0x20] sm:$0xf]
    %v1268 = vld [vmem:[#allocation7 + $0x24] sm:$0xf]
    %v1269 = vld [vmem:[#allocation7 + $0x28] sm:$0xf]
    %v1270 = vld [vmem:[#allocation7 + $0x2c] sm:$0xf]
    %v1271 = vld [vmem:[#allocation7 + $0x30] sm:$0xf]
    %v1272 = vld [vmem:[#allocation7 + $0x34] sm:$0xf]
    %v1273 = vld [vmem:[#allocation7 + $0x38] sm:$0xf]
    %v1274 = vld [vmem:[#allocation7 + $0x3c] sm:$0xf]
    %v1275 = vld [vmem:[%s6] sm:$0x1]
    %v1277 = vperm.slane %v1275, 0
    %v1281 = vunpack.c.l.b16 %v1257
    %v1282 = vunpack.c.l.b16 %v1258
    %v1283 = vsel %vm943, %v1282, %v1281
    %v1284 = vpack.c.b16 %v1283, %v1283
    %v1302 = vunpack.c.l.b16 %v1259
    %v1303 = vunpack.c.l.b16 %v1260
    %v1304 = vunpack.c.l.b16 %v1261
    %v1305 = vunpack.c.l.b16 %v1262
    %v1306 = vunpack.c.l.b16 %v1263
    %v1307 = vunpack.c.l.b16 %v1264
    %v1308 = vunpack.c.l.b16 %v1265
    %v1309 = vunpack.c.l.b16 %v1266
    %v1310 = vunpack.c.l.b16 %v1267
    %v1311 = vunpack.c.l.b16 %v1268
    %v1312 = vunpack.c.l.b16 %v1269
    %v1313 = vunpack.c.l.b16 %v1270
    %v1314 = vunpack.c.l.b16 %v1271
    %v1315 = vunpack.c.l.b16 %v1272
    %v1316 = vunpack.c.l.b16 %v1273
    %v1317 = vunpack.c.l.b16 %v1274
    %v1318 = vpack.c.b16 %v1303, %v1302
    %v1319 = vpack.c.b16 %v1305, %v1304
    %v1320 = vpack.c.b16 %v1307, %v1306
    %v1321 = vpack.c.b16 %v1309, %v1308
    %v1322 = vpack.c.b16 %v1311, %v1310
    %v1323 = vpack.c.b16 %v1313, %v1312
    %v1324 = vpack.c.b16 %v1315, %v1314
    %v1325 = vpack.c.b16 %v1317, %v1316
    %1334 = vmatpush.bf16.msra.mxu0 %v1325
    %1335 = vmatpush.bf16.msra.mxu0 %v1324
    %1336 = vmatpush.bf16.msra.mxu0 %v1323
    %1337 = vmatpush.bf16.msra.mxu0 %v1322
    %1338 = vmatpush.bf16.msra.mxu0 %v1321
    %1339 = vmatpush.bf16.msra.mxu0 %v1320
    %1340 = vmatpush.bf16.msra.mxu0 %v1319
    %1341 = vmatpush.bf16.msra.mxu0 %v1318
    %1342 = vmatmul.bf16.gmra.mxu0 %v1284
    %v1343 = vpop.f32.mrf.mxu0
    %v1344 = vadd.f32 %v1277, %v1343
    %v1345 = vpop.f32.mrf.mxu0
    %1346 = vdwg.mxu0
    %v1347 = vmax.f32 %v1344, 0.0
    %v1348 = vpack.c.bf16 %v1347, %v1347
    %v1349 = vld [vmem:[#allocation8] sm:$0xf]
    %v1350 = vld [vmem:[#allocation8 + $0x4] sm:$0xf]
    %v1351 = vld [vmem:[#allocation8 + $0x8] sm:$0xf]
    %v1352 = vld [vmem:[#allocation8 + $0xc] sm:$0xf]
    %v1353 = vld [vmem:[#allocation8 + $0x10] sm:$0xf]
    %v1354 = vld [vmem:[#allocation8 + $0x14] sm:$0xf]
    %v1355 = vld [vmem:[#allocation8 + $0x18] sm:$0xf]
    %v1356 = vld [vmem:[#allocation8 + $0x1c] sm:$0xf]
    %v1357 = vld [vmem:[#allocation8 + $0x20] sm:$0xf]
    %v1358 = vld [vmem:[#allocation8 + $0x24] sm:$0xf]
    %v1359 = vld [vmem:[#allocation8 + $0x28] sm:$0xf]
    %v1360 = vld [vmem:[#allocation8 + $0x2c] sm:$0xf]
    %v1361 = vld [vmem:[#allocation8 + $0x30] sm:$0xf]
    %v1362 = vld [vmem:[#allocation8 + $0x34] sm:$0xf]
    %v1363 = vld [vmem:[#allocation8 + $0x38] sm:$0xf]
    %v1364 = vld [vmem:[#allocation8 + $0x3c] sm:$0xf]
    %v1365 = vld [vmem:[%s8] sm:$0x1]
    %v1367 = vperm.slane %v1365, 0
    %v1385 = vunpack.c.l.b16 %v1349
    %v1386 = vunpack.c.l.b16 %v1350
    %v1387 = vunpack.c.l.b16 %v1351
    %v1388 = vunpack.c.l.b16 %v1352
    %v1389 = vunpack.c.l.b16 %v1353
    %v1390 = vunpack.c.l.b16 %v1354
    %v1391 = vunpack.c.l.b16 %v1355
    %v1392 = vunpack.c.l.b16 %v1356
    %v1393 = vunpack.c.l.b16 %v1357
    %v1394 = vunpack.c.l.b16 %v1358
    %v1395 = vunpack.c.l.b16 %v1359
    %v1396 = vunpack.c.l.b16 %v1360
    %v1397 = vunpack.c.l.b16 %v1361
    %v1398 = vunpack.c.l.b16 %v1362
    %v1399 = vunpack.c.l.b16 %v1363
    %v1400 = vunpack.c.l.b16 %v1364
    %v1401 = vpack.c.b16 %v1386, %v1385
    %v1402 = vpack.c.b16 %v1388, %v1387
    %v1403 = vpack.c.b16 %v1390, %v1389
    %v1404 = vpack.c.b16 %v1392, %v1391
    %v1405 = vpack.c.b16 %v1394, %v1393
    %v1406 = vpack.c.b16 %v1396, %v1395
    %v1407 = vpack.c.b16 %v1398, %v1397
    %v1408 = vpack.c.b16 %v1400, %v1399
    %1417 = vmatpush.bf16.msra.mxu0 %v1408
    %1418 = vmatpush.bf16.msra.mxu0 %v1407
    %1419 = vmatpush.bf16.msra.mxu0 %v1406
    %1420 = vmatpush.bf16.msra.mxu0 %v1405
    %1421 = vmatpush.bf16.msra.mxu0 %v1404
    %1422 = vmatpush.bf16.msra.mxu0 %v1403
    %1423 = vmatpush.bf16.msra.mxu0 %v1402
    %1424 = vmatpush.bf16.msra.mxu0 %v1401
    %1425 = vmatmul.bf16.gmra.mxu0 %v1348
    %v1426 = vpop.f32.mrf.mxu0
    %v1427 = vadd.f32 %v1367, %v1426
    %v1428 = vpop.f32.mrf.mxu0
    %1429 = vdwg.mxu0
    %v1430 = vxor.u32 %v1427, 2147483648
    %v1431 = vmul.f32 %v1430, 1.442695
    %v1432 = vpow.pop %v1431
    %v1433 = vadd.f32 %v1432, 1.0
    %v1434 = vrcp.pop %v1433
    %v1435 = vmul.f32 %v1433, %v1434
    %v1436 = vsub.f32 1.0, %v1435
    %v1437 = vmul.f32 %v1434, %v1436
    %v1438 = vadd.f32 %v1434, %v1437
    %vm1439 = vweird.f32 %v1433
    %vm1440 = vweird.f32 %v1434
    %vm1441 = vmor %vm1439, %vm1440
    %v1442 = vsel %vm1441, %v1434, %v1438
    %v1443 = vand.u32 2147483647, %v1433
    %vm1444 = vcmp.eq.f32.partialorder %v1443, 8.507059e+37
    %v1445 = vand.u32 %v1433, 2147483648
    %v1446 = vor.u32 1.1754944e-38, %v1445
    %v1447 = vsel %vm1444, %v1446, %v1442
    %v1448 = vmul.f32 1.0, %v1447
    %1449 = vst [vmem:[#allocation10] sm:$0x3] %v1448
    // Predicated region
    $region54: #{tpu_custom_call.1} parent=1 // pred_check
      _
    $region55: #{tpu_custom_call.1} parent=1 // pred_check_branch
      %1451 = sbr.rel (0) target = $region57
    $region56: #{tpu_custom_call.1} parent=1 // pred_region
      %1453 = vsyncadd [#allocation4], 0
      %s1455 = sshll.u32 [#allocation10], 4
      %s1456 = int_to_ptr.vmem [resolvable:$true] %s1455
      %s1457 = sshll.u32 %s9, 4
      %s1458 = int_to_ptr.hbm [resolvable:$true] %s1457
      %1460 = dma.vmem_to_hbm [thread:$0]  %s1456, 32, %s1458, [#allocation4]
    $region57: #{tpu_custom_call.1} parent=1 // pred_fallthru
      _
    // Predicated region
    $region58: #{tpu_custom_call.1} parent=1 // pred_check
      _
    $region59: #{tpu_custom_call.1} parent=1 // pred_check_branch
      %1462 = sbr.rel (0) target = $region61
    $region60: #{tpu_custom_call.1} parent=1 // pred_region
      %1464 = dma.done [#allocation4], 32
    $region61: #{tpu_custom_call.1} parent=1 // pred_fallthru
      _
    %1465 = vsyncpa [#allocation3], 1
    %1466 = vsyncpa [#allocation6], 1
    %1467 = vsyncpa [#allocation9], 1
    %1468 = vsyncpa [#allocation4], 1

</llo_original>
